<compile_context>
chip_gen: v7x
topology: tpu7x:2x2x1
jax: 0.10.0
libtpu: 0.0.40
codegen_flags: <defaults>
</compile_context>

<pallas_src>
import functools

import jax
import jax.numpy as jnp
from jax import lax
from jax.experimental import pallas as pl
from jax.experimental.pallas import tpu as pltpu


def _dws_conv_kernel(x_ref, weff_ref, b_ref, o_ref, *, K, stride, dilation,
                     TH, W_out_p):
    """One grid step == one (image, H-tile) pair.

    x_ref:    (S*S, Hph, Wph, Cin_p)  phase-decomposed padded image (resident per n)
    weff_ref: (K*K, Cin_p, Cout_p)    per-tap effective weights  dw ⊙ pw
    b_ref:    (1, Cout_p)             folded bias (f32)
    o_ref:    (TH, W_out_p, Cout_p)   output tile
    """
    ht = pl.program_id(1)
    Cin_p = x_ref.shape[-1]
    Cout_p = o_ref.shape[-1]
    R = TH * W_out_p
    h_base = ht * TH

    # f32 accumulator kept as a value (registers / compiler-managed), initialized with
    # the folded bias; the output block is written exactly once per grid step.
    acc = jnp.broadcast_to(b_ref[...].astype(jnp.float32), (R, Cout_p))

    # K*K taps: each is a (R, Cin_p) x (Cin_p, Cout_p) MXU matmul.  Stride has been
    # phase-decomposed in the wrapper, so every read here is a unit-stride window.
    for kh in range(K):
        for kw in range(K):
            qh, rh = divmod(kh * dilation, stride)
            qw, rw = divmod(kw * dilation, stride)
            p = rh * stride + rw
            patch = x_ref[p, pl.ds(h_base + qh, TH), pl.ds(qw, W_out_p), :]
            # W_out_p % 8 == 0  =>  this reshape is layout-free (no relayout copy).
            acc = acc + jnp.dot(patch.reshape(R, Cin_p),
                                weff_ref[kh * K + kw],
                                preferred_element_type=jnp.float32)

    o_ref[...] = acc.reshape(TH, W_out_p, Cout_p).astype(o_ref.dtype)


def _round_up(x, m):
    return ((x + m - 1) // m) * m


def _pick_h_tile(H_out, W_out_p, n_batch, target_rows=192):
    """Rows-per-tile so R = TH*W_out_p is close to target_rows (MXU M dim).

    R is automatically a multiple of 8 because W_out_p is.  Also keeps at least two
    total grid steps so both TensorCores (megacore / v7x) get work.
    """
    th = max(1, min(H_out, target_rows // W_out_p))
    if n_batch * pl.cdiv(H_out, th) < 2 and H_out > 1:
        th = pl.cdiv(H_out, 2)
    return int(th)


def depthwise_separable_conv2d(x_nchw, dw_weight, dw_bias, pw_weight, pw_bias, *,
                               stride=1, padding=0, dilation=1,
                               compute_dtype=jnp.bfloat16, target_rows=192):
    """Pallas implementation of DepthwiseSeparableConv2d.forward.

    x_nchw:    (N, Cin, H, W)
    dw_weight: (Cin, 1, K, K)     depthwise Conv2d weight (PyTorch layout)
    dw_bias:   (Cin,)
    pw_weight: (Cout, Cin, 1, 1)  pointwise Conv2d weight (PyTorch layout)
    pw_bias:   (Cout,)
    returns:   (N, Cout, H_out, W_out) in x's dtype (accumulation is f32).
    """
    N, Cin, H, W = x_nchw.shape
    K = dw_weight.shape[-1]
    Cout = pw_weight.shape[0]
    out_dtype = x_nchw.dtype
    s = stride

    H_out = (H + 2 * padding - dilation * (K - 1) - 1) // s + 1
    W_out = (W + 2 * padding - dilation * (K - 1) - 1) // s + 1

    LANE, SUB = 128, 8
    Cin_p = _round_up(Cin, LANE)   # tiny-C cases pay a padding tax (correct, zeros sliced)
    Cout_p = _round_up(Cout, LANE)
    # TODO(synk): on v6e/v7x with Cout > 128, consider 256-wide N tiles / tap-pair
    # contraction fusion to fill the 256x256 MXU (bench; skip on v5e).

    W_out_p = _round_up(W_out, SUB)                 # sublane-aligned R and dense stores
    TH = _pick_h_tile(H_out, W_out_p, N, target_rows)
    n_ht = int(pl.cdiv(H_out, TH))
    H_out_p = n_ht * TH                             # extra rows computed then sliced off

    # --- input: NCHW -> NHWC, conv zero-pad + alignment pad, channel pad, phase split.
    # TODO(synk): keep the surrounding model in NHWC to drop these full-tensor transposes.
    halo = dilation * (K - 1)
    Hp_needed = (H_out_p - 1) * s + halo + 1
    Wp_needed = (W_out_p - 1) * s + halo + 1
    x = jnp.transpose(x_nchw, (0, 2, 3, 1))
    x = jnp.pad(x, ((0, 0),
                    (padding, max(0, Hp_needed - H - padding)),
                    (padding, max(0, Wp_needed - W - padding)),
                    (0, Cin_p - Cin)))

    # Phase decomposition of the stride (space-to-depth): tap (kh, kw) becomes a
    # unit-stride read at offset (kh*d // s, kw*d // s) inside phase
    # (kh*d % s, kw*d % s).  For stride == 1 this is a single phase (no-op).
    Hph = H_out_p + halo // s
    Wph = _round_up(W_out_p + halo // s, SUB)
    phases = []
    for rh in range(s):
        for rw in range(s):
            ph = x[:, rh::s, rw::s, :][:, :Hph, :Wph, :]
            ph = jnp.pad(ph, ((0, 0), (0, Hph - ph.shape[1]),
                              (0, Wph - ph.shape[2]), (0, 0)))
            phases.append(ph)
    x_ph = jnp.stack(phases, axis=1).astype(compute_dtype)  # (N, s*s, Hph, Wph, Cin_p)
    SS = s * s

    # --- effective per-tap weights W_eff[kh*K+kw] = diag(dw[:, kh, kw]) @ pw,
    # and folded bias b_eff = pw_b + dw_b @ pw.
    dwt = jnp.transpose(dw_weight[:, 0, :, :], (1, 2, 0)).reshape(K * K, Cin)
    pw = jnp.transpose(pw_weight[:, :, 0, 0], (1, 0))                    # (Cin, Cout)
    weff = dwt[:, :, None].astype(jnp.float32) * pw[None].astype(jnp.float32)
    weff = jnp.pad(weff, ((0, 0), (0, Cin_p - Cin), (0, Cout_p - Cout)))
    weff = weff.astype(compute_dtype)
    b_eff = (pw_bias.astype(jnp.float32) +
             dw_bias.astype(jnp.float32) @ pw.astype(jnp.float32))
    b_eff = jnp.pad(b_eff, (0, Cout_p - Cout)).reshape(1, Cout_p)

    # --- VMEM budgeting (generation-aware) and image-block buffering.
    itemsize = jnp.dtype(compute_dtype).itemsize
    out_itemsize = jnp.dtype(out_dtype).itemsize
    img_bytes = SS * Hph * Wph * Cin_p * itemsize
    weff_bytes = K * K * Cin_p * Cout_p * itemsize
    bias_bytes = Cout_p * 4
    tile_bytes = TH * W_out_p * Cout_p * out_itemsize

    # Large resident images: single-buffer the image block (it only changes once per
    # batch element) to halve residency — matters on v7x (64 MiB VMEM / TC).
    # TODO(synk): full halo-tiled manual-DMA path (memory_space=pl.ANY + double-buffered
    # (TH*stride + halo, Wph, Cin_p) slabs) for images too large to keep resident at all.
    single_buffer_img = img_bytes > (8 << 20)
    img_bufs = 1 if single_buffer_img else 2

    try:
        phys_vmem = int(getattr(pltpu.get_tpu_info(), "vmem_capacity_bytes", 0)) or (64 << 20)
    except Exception:  # no TPU info available at trace time
        phys_vmem = 64 << 20
    need = img_bufs * img_bytes + 2 * (weff_bytes + bias_bytes + tile_bytes)
    need = int(need * 1.25) + (6 << 20)     # headroom: acc spills + compiler scratch
    vmem_limit = int(max(32 << 20, min(need, phys_vmem - (24 << 20))))

    img_imap = lambda n, ht: (n, 0, 0, 0, 0)
    if single_buffer_img:
        img_spec = pl.BlockSpec((None, SS, Hph, Wph, Cin_p), img_imap,
                                pipeline_mode=pl.Buffered(1))
    else:
        img_spec = pl.BlockSpec((None, SS, Hph, Wph, Cin_p), img_imap)

    kernel = functools.partial(_dws_conv_kernel, K=K, stride=s, dilation=dilation,
                               TH=TH, W_out_p=W_out_p)

    flops = 2 * N * n_ht * TH * W_out_p * K * K * Cin_p * Cout_p
    bytes_accessed = (N * img_bytes + weff_bytes + bias_bytes +
                      N * H_out_p * W_out_p * Cout_p * out_itemsize)

    out = pl.pallas_call(
        kernel,
        out_shape=jax.ShapeDtypeStruct((N, H_out_p, W_out_p, Cout_p), out_dtype),
        grid_spec=pltpu.PrefetchScalarGridSpec(
            num_scalar_prefetch=0,
            grid=(N, n_ht),
            in_specs=[
                img_spec,
                pl.BlockSpec((K * K, Cin_p, Cout_p), lambda n, ht: (0, 0, 0)),
                pl.BlockSpec((1, Cout_p), lambda n, ht: (0, 0)),
            ],
            out_specs=pl.BlockSpec((None, TH, W_out_p, Cout_p),
                                   lambda n, ht: (n, ht, 0, 0)),
        ),
        compiler_params=pltpu.CompilerParams(
            dimension_semantics=("parallel", "parallel"),
            vmem_limit_bytes=vmem_limit,
        ),
        cost_estimate=pl.CostEstimate(flops=flops, transcendentals=0,
                                      bytes_accessed=bytes_accessed),
    )(x_ph, weff, b_eff)

    # Drop alignment rows/cols and channel padding, NHWC -> NCHW (PyTorch convention).
    out = out[:, :H_out, :W_out, :Cout]
    return jnp.transpose(out, (0, 3, 1, 2))


def _reference(x_nchw, dw_weight, dw_bias, pw_weight, pw_bias,
               *, stride, padding, dilation):
    """Pure-JAX reference using lax.conv_general_dilated (PyTorch semantics)."""
    Cin = x_nchw.shape[1]
    dn = lax.conv_dimension_numbers(x_nchw.shape, dw_weight.shape,
                                    ("NCHW", "OIHW", "NCHW"))
    y = lax.conv_general_dilated(
        x_nchw, dw_weight, window_strides=(stride, stride),
        padding=[(padding, padding), (padding, padding)],
        rhs_dilation=(dilation, dilation),
        dimension_numbers=dn, feature_group_count=Cin)
    y = y + dw_bias.reshape(1, -1, 1, 1)
    dn2 = lax.conv_dimension_numbers(y.shape, pw_weight.shape,
                                     ("NCHW", "OIHW", "NCHW"))
    z = lax.conv_general_dilated(
        y, pw_weight, window_strides=(1, 1), padding=[(0, 0), (0, 0)],
        dimension_numbers=dn2)
    return z + pw_bias.reshape(1, -1, 1, 1)


if __name__ == "__main__":
    # Small shapes consistent with the module: batch=2, in_ch=4, out_ch=8,
    # spatial=16, kernel=3, stride=1, padding=1, dilation=1.
    N, Cin, H, W = 2, 4, 16, 16
    Cout, K = 8, 3
    stride, padding, dilation = 1, 1, 1

    key = jax.random.PRNGKey(0)
    k1, k2, k3, k4, k5 = jax.random.split(key, 5)
    x = jax.random.normal(k1, (N, Cin, H, W), jnp.float32)
    dw_weight = jax.random.normal(k2, (Cin, 1, K, K), jnp.float32) * 0.1
    dw_bias = jax.random.normal(k3, (Cin,), jnp.float32) * 0.1
    pw_weight = jax.random.normal(k4, (Cout, Cin, 1, 1), jnp.float32) * 0.1
    pw_bias = jax.random.normal(k5, (Cout,), jnp.float32) * 0.1

    ref = _reference(x, dw_weight, dw_bias, pw_weight, pw_bias,
                     stride=stride, padding=padding, dilation=dilation)

    # f32 compute path: tight tolerance against the two-conv lax reference.
    out_f32 = depthwise_separable_conv2d(
        x, dw_weight, dw_bias, pw_weight, pw_bias,
        stride=stride, padding=padding, dilation=dilation,
        compute_dtype=jnp.float32)
    out_f32 = jax.block_until_ready(out_f32)
    assert out_f32.shape == ref.shape, (out_f32.shape, ref.shape)
    assert jnp.allclose(out_f32, ref, atol=1e-4, rtol=1e-4), "f32 mismatch vs reference"

    # Default bf16 MXU-feed path (f32 accumulation): looser tolerance.
    out_bf16 = depthwise_separable_conv2d(
        x, dw_weight, dw_bias, pw_weight, pw_bias,
        stride=stride, padding=padding, dilation=dilation)
    out_bf16 = jax.block_until_ready(out_bf16)
    assert out_bf16.shape == ref.shape, (out_bf16.shape, ref.shape)
    assert jnp.allclose(out_bf16, ref, atol=2e-2, rtol=2e-2), "bf16 mismatch vs reference"

    print("KERNEL_OK")
</pallas_src>

<mosaic_0001>
module attributes {stable_mosaic.version = 11 : i64} {
  func.func @_dws_conv_kernel(%arg0: i32, %arg1: i32, %arg2: memref<1x1x26x24x128xf32, #tpu.memory_space<vmem>>, %arg3: memref<9x128x128xf32, #tpu.memory_space<vmem>>, %arg4: memref<1x128xf32, #tpu.memory_space<vmem>>, %arg5: memref<1x12x16x128xf32, #tpu.memory_space<vmem>>) attributes {dimension_semantics = [#tpu.dimension_semantics<parallel>, #tpu.dimension_semantics<parallel>], iteration_bounds = array<i64: 2, 2>, scalar_prefetch = 0 : i64, scratch_operands = 0 : i64, tpu.core_type = #tpu.core_type<tc>, window_params = [{transform_indices = @transform_0, window_bounds = array<i64: 1, 1, 26, 24, 128>}, {pipeline_mode = #tpu.pipeline_mode<synchronous>, transform_indices = @transform_1, window_bounds = array<i64: 9, 128, 128>}, {pipeline_mode = #tpu.pipeline_mode<synchronous>, transform_indices = @transform_2, window_bounds = array<i64: 1, 128>}, {transform_indices = @transform_3, window_bounds = array<i64: 1, 12, 16, 128>}]} {
    %c12_i32 = arith.constant 12 : i32
    %0 = arith.muli %arg1, %c12_i32 : i32
    %c0 = arith.constant 0 : index
    %c0_0 = arith.constant 0 : index
    %1 = vector.load %arg4[%c0, %c0_0] : memref<1x128xf32, #tpu.memory_space<vmem>>, vector<1x128xf32>
    %2 = vector.shape_cast %1 : vector<1x128xf32> to vector<1x128xf32>
    %3 = vector.broadcast %2 : vector<1x128xf32> to vector<192x128xf32>
    %c0_i32 = arith.constant 0 : i32
    %4 = arith.addi %0, %c0_i32 : i32
    %c0_1 = arith.constant 0 : index
    %c0_2 = arith.constant 0 : index
    %5 = arith.index_cast %4 : i32 to index
    %c0_3 = arith.constant 0 : index
    %c0_4 = arith.constant 0 : index
    %6 = vector.load %arg2[%c0_1, %c0_2, %5, %c0_3, %c0_4] : memref<1x1x26x24x128xf32, #tpu.memory_space<vmem>>, vector<1x1x12x16x128xf32>
    %7 = vector.shape_cast %6 : vector<1x1x12x16x128xf32> to vector<12x16x128xf32>
    %8 = vector.shape_cast %7 : vector<12x16x128xf32> to vector<192x128xf32>
    %c0_5 = arith.constant 0 : index
    %c0_6 = arith.constant 0 : index
    %c0_7 = arith.constant 0 : index
    %9 = vector.load %arg3[%c0_5, %c0_6, %c0_7] : memref<9x128x128xf32, #tpu.memory_space<vmem>>, vector<1x128x128xf32>
    %10 = vector.shape_cast %9 : vector<1x128x128xf32> to vector<128x128xf32>
    %cst = arith.constant dense<0.000000e+00> : vector<192x128xf32>
    %11 = tpu.matmul %8, %10, %cst {dimension_numbers = #tpu.dot_dimension_numbers<[1], [0], [0], [1], [0, 0, 1, 1], [], []>} : vector<192x128xf32>, vector<128x128xf32>, vector<192x128xf32> -> vector<192x128xf32>
    %12 = arith.addf %3, %11 : vector<192x128xf32>
    %c0_i32_8 = arith.constant 0 : i32
    %13 = arith.addi %0, %c0_i32_8 : i32
    %c0_9 = arith.constant 0 : index
    %c0_10 = arith.constant 0 : index
    %14 = arith.index_cast %13 : i32 to index
    %c1 = arith.constant 1 : index
    %c0_11 = arith.constant 0 : index
    %15 = vector.load %arg2[%c0_9, %c0_10, %14, %c1, %c0_11] : memref<1x1x26x24x128xf32, #tpu.memory_space<vmem>>, vector<1x1x12x16x128xf32>
    %16 = vector.shape_cast %15 : vector<1x1x12x16x128xf32> to vector<12x16x128xf32>
    %17 = vector.shape_cast %16 : vector<12x16x128xf32> to vector<192x128xf32>
    %c1_12 = arith.constant 1 : index
    %c0_13 = arith.constant 0 : index
    %c0_14 = arith.constant 0 : index
    %18 = vector.load %arg3[%c1_12, %c0_13, %c0_14] : memref<9x128x128xf32, #tpu.memory_space<vmem>>, vector<1x128x128xf32>
    %19 = vector.shape_cast %18 : vector<1x128x128xf32> to vector<128x128xf32>
    %cst_15 = arith.constant dense<0.000000e+00> : vector<192x128xf32>
    %20 = tpu.matmul %17, %19, %cst_15 {dimension_numbers = #tpu.dot_dimension_numbers<[1], [0], [0], [1], [0, 0, 1, 1], [], []>} : vector<192x128xf32>, vector<128x128xf32>, vector<192x128xf32> -> vector<192x128xf32>
    %21 = arith.addf %12, %20 : vector<192x128xf32>
    %c0_i32_16 = arith.constant 0 : i32
    %22 = arith.addi %0, %c0_i32_16 : i32
    %c0_17 = arith.constant 0 : index
    %c0_18 = arith.constant 0 : index
    %23 = arith.index_cast %22 : i32 to index
    %c2 = arith.constant 2 : index
    %c0_19 = arith.constant 0 : index
    %24 = vector.load %arg2[%c0_17, %c0_18, %23, %c2, %c0_19] : memref<1x1x26x24x128xf32, #tpu.memory_space<vmem>>, vector<1x1x12x16x128xf32>
    %25 = vector.shape_cast %24 : vector<1x1x12x16x128xf32> to vector<12x16x128xf32>
    %26 = vector.shape_cast %25 : vector<12x16x128xf32> to vector<192x128xf32>
    %c2_20 = arith.constant 2 : index
    %c0_21 = arith.constant 0 : index
    %c0_22 = arith.constant 0 : index
    %27 = vector.load %arg3[%c2_20, %c0_21, %c0_22] : memref<9x128x128xf32, #tpu.memory_space<vmem>>, vector<1x128x128xf32>
    %28 = vector.shape_cast %27 : vector<1x128x128xf32> to vector<128x128xf32>
    %cst_23 = arith.constant dense<0.000000e+00> : vector<192x128xf32>
    %29 = tpu.matmul %26, %28, %cst_23 {dimension_numbers = #tpu.dot_dimension_numbers<[1], [0], [0], [1], [0, 0, 1, 1], [], []>} : vector<192x128xf32>, vector<128x128xf32>, vector<192x128xf32> -> vector<192x128xf32>
    %30 = arith.addf %21, %29 : vector<192x128xf32>
    %c1_i32 = arith.constant 1 : i32
    %31 = arith.addi %0, %c1_i32 : i32
    %c0_24 = arith.constant 0 : index
    %c0_25 = arith.constant 0 : index
    %32 = arith.index_cast %31 : i32 to index
    %c0_26 = arith.constant 0 : index
    %c0_27 = arith.constant 0 : index
    %33 = vector.load %arg2[%c0_24, %c0_25, %32, %c0_26, %c0_27] : memref<1x1x26x24x128xf32, #tpu.memory_space<vmem>>, vector<1x1x12x16x128xf32>
    %34 = vector.shape_cast %33 : vector<1x1x12x16x128xf32> to vector<12x16x128xf32>
    %35 = vector.shape_cast %34 : vector<12x16x128xf32> to vector<192x128xf32>
    %c3 = arith.constant 3 : index
    %c0_28 = arith.constant 0 : index
    %c0_29 = arith.constant 0 : index
    %36 = vector.load %arg3[%c3, %c0_28, %c0_29] : memref<9x128x128xf32, #tpu.memory_space<vmem>>, vector<1x128x128xf32>
    %37 = vector.shape_cast %36 : vector<1x128x128xf32> to vector<128x128xf32>
    %cst_30 = arith.constant dense<0.000000e+00> : vector<192x128xf32>
    %38 = tpu.matmul %35, %37, %cst_30 {dimension_numbers = #tpu.dot_dimension_numbers<[1], [0], [0], [1], [0, 0, 1, 1], [], []>} : vector<192x128xf32>, vector<128x128xf32>, vector<192x128xf32> -> vector<192x128xf32>
    %39 = arith.addf %30, %38 : vector<192x128xf32>
    %c1_i32_31 = arith.constant 1 : i32
    %40 = arith.addi %0, %c1_i32_31 : i32
    %c0_32 = arith.constant 0 : index
    %c0_33 = arith.constant 0 : index
    %41 = arith.index_cast %40 : i32 to index
    %c1_34 = arith.constant 1 : index
    %c0_35 = arith.constant 0 : index
    %42 = vector.load %arg2[%c0_32, %c0_33, %41, %c1_34, %c0_35] : memref<1x1x26x24x128xf32, #tpu.memory_space<vmem>>, vector<1x1x12x16x128xf32>
    %43 = vector.shape_cast %42 : vector<1x1x12x16x128xf32> to vector<12x16x128xf32>
    %44 = vector.shape_cast %43 : vector<12x16x128xf32> to vector<192x128xf32>
    %c4 = arith.constant 4 : index
    %c0_36 = arith.constant 0 : index
    %c0_37 = arith.constant 0 : index
    %45 = vector.load %arg3[%c4, %c0_36, %c0_37] : memref<9x128x128xf32, #tpu.memory_space<vmem>>, vector<1x128x128xf32>
    %46 = vector.shape_cast %45 : vector<1x128x128xf32> to vector<128x128xf32>
    %cst_38 = arith.constant dense<0.000000e+00> : vector<192x128xf32>
    %47 = tpu.matmul %44, %46, %cst_38 {dimension_numbers = #tpu.dot_dimension_numbers<[1], [0], [0], [1], [0, 0, 1, 1], [], []>} : vector<192x128xf32>, vector<128x128xf32>, vector<192x128xf32> -> vector<192x128xf32>
    %48 = arith.addf %39, %47 : vector<192x128xf32>
    %c1_i32_39 = arith.constant 1 : i32
    %49 = arith.addi %0, %c1_i32_39 : i32
    %c0_40 = arith.constant 0 : index
    %c0_41 = arith.constant 0 : index
    %50 = arith.index_cast %49 : i32 to index
    %c2_42 = arith.constant 2 : index
    %c0_43 = arith.constant 0 : index
    %51 = vector.load %arg2[%c0_40, %c0_41, %50, %c2_42, %c0_43] : memref<1x1x26x24x128xf32, #tpu.memory_space<vmem>>, vector<1x1x12x16x128xf32>
    %52 = vector.shape_cast %51 : vector<1x1x12x16x128xf32> to vector<12x16x128xf32>
    %53 = vector.shape_cast %52 : vector<12x16x128xf32> to vector<192x128xf32>
    %c5 = arith.constant 5 : index
    %c0_44 = arith.constant 0 : index
    %c0_45 = arith.constant 0 : index
    %54 = vector.load %arg3[%c5, %c0_44, %c0_45] : memref<9x128x128xf32, #tpu.memory_space<vmem>>, vector<1x128x128xf32>
    %55 = vector.shape_cast %54 : vector<1x128x128xf32> to vector<128x128xf32>
    %cst_46 = arith.constant dense<0.000000e+00> : vector<192x128xf32>
    %56 = tpu.matmul %53, %55, %cst_46 {dimension_numbers = #tpu.dot_dimension_numbers<[1], [0], [0], [1], [0, 0, 1, 1], [], []>} : vector<192x128xf32>, vector<128x128xf32>, vector<192x128xf32> -> vector<192x128xf32>
    %57 = arith.addf %48, %56 : vector<192x128xf32>
    %c2_i32 = arith.constant 2 : i32
    %58 = arith.addi %0, %c2_i32 : i32
    %c0_47 = arith.constant 0 : index
    %c0_48 = arith.constant 0 : index
    %59 = arith.index_cast %58 : i32 to index
    %c0_49 = arith.constant 0 : index
    %c0_50 = arith.constant 0 : index
    %60 = vector.load %arg2[%c0_47, %c0_48, %59, %c0_49, %c0_50] : memref<1x1x26x24x128xf32, #tpu.memory_space<vmem>>, vector<1x1x12x16x128xf32>
    %61 = vector.shape_cast %60 : vector<1x1x12x16x128xf32> to vector<12x16x128xf32>
    %62 = vector.shape_cast %61 : vector<12x16x128xf32> to vector<192x128xf32>
    %c6 = arith.constant 6 : index
    %c0_51 = arith.constant 0 : index
    %c0_52 = arith.constant 0 : index
    %63 = vector.load %arg3[%c6, %c0_51, %c0_52] : memref<9x128x128xf32, #tpu.memory_space<vmem>>, vector<1x128x128xf32>
    %64 = vector.shape_cast %63 : vector<1x128x128xf32> to vector<128x128xf32>
    %cst_53 = arith.constant dense<0.000000e+00> : vector<192x128xf32>
    %65 = tpu.matmul %62, %64, %cst_53 {dimension_numbers = #tpu.dot_dimension_numbers<[1], [0], [0], [1], [0, 0, 1, 1], [], []>} : vector<192x128xf32>, vector<128x128xf32>, vector<192x128xf32> -> vector<192x128xf32>
    %66 = arith.addf %57, %65 : vector<192x128xf32>
    %c2_i32_54 = arith.constant 2 : i32
    %67 = arith.addi %0, %c2_i32_54 : i32
    %c0_55 = arith.constant 0 : index
    %c0_56 = arith.constant 0 : index
    %68 = arith.index_cast %67 : i32 to index
    %c1_57 = arith.constant 1 : index
    %c0_58 = arith.constant 0 : index
    %69 = vector.load %arg2[%c0_55, %c0_56, %68, %c1_57, %c0_58] : memref<1x1x26x24x128xf32, #tpu.memory_space<vmem>>, vector<1x1x12x16x128xf32>
    %70 = vector.shape_cast %69 : vector<1x1x12x16x128xf32> to vector<12x16x128xf32>
    %71 = vector.shape_cast %70 : vector<12x16x128xf32> to vector<192x128xf32>
    %c7 = arith.constant 7 : index
    %c0_59 = arith.constant 0 : index
    %c0_60 = arith.constant 0 : index
    %72 = vector.load %arg3[%c7, %c0_59, %c0_60] : memref<9x128x128xf32, #tpu.memory_space<vmem>>, vector<1x128x128xf32>
    %73 = vector.shape_cast %72 : vector<1x128x128xf32> to vector<128x128xf32>
    %cst_61 = arith.constant dense<0.000000e+00> : vector<192x128xf32>
    %74 = tpu.matmul %71, %73, %cst_61 {dimension_numbers = #tpu.dot_dimension_numbers<[1], [0], [0], [1], [0, 0, 1, 1], [], []>} : vector<192x128xf32>, vector<128x128xf32>, vector<192x128xf32> -> vector<192x128xf32>
    %75 = arith.addf %66, %74 : vector<192x128xf32>
    %c2_i32_62 = arith.constant 2 : i32
    %76 = arith.addi %0, %c2_i32_62 : i32
    %c0_63 = arith.constant 0 : index
    %c0_64 = arith.constant 0 : index
    %77 = arith.index_cast %76 : i32 to index
    %c2_65 = arith.constant 2 : index
    %c0_66 = arith.constant 0 : index
    %78 = vector.load %arg2[%c0_63, %c0_64, %77, %c2_65, %c0_66] : memref<1x1x26x24x128xf32, #tpu.memory_space<vmem>>, vector<1x1x12x16x128xf32>
    %79 = vector.shape_cast %78 : vector<1x1x12x16x128xf32> to vector<12x16x128xf32>
    %80 = vector.shape_cast %79 : vector<12x16x128xf32> to vector<192x128xf32>
    %c8 = arith.constant 8 : index
    %c0_67 = arith.constant 0 : index
    %c0_68 = arith.constant 0 : index
    %81 = vector.load %arg3[%c8, %c0_67, %c0_68] : memref<9x128x128xf32, #tpu.memory_space<vmem>>, vector<1x128x128xf32>
    %82 = vector.shape_cast %81 : vector<1x128x128xf32> to vector<128x128xf32>
    %cst_69 = arith.constant dense<0.000000e+00> : vector<192x128xf32>
    %83 = tpu.matmul %80, %82, %cst_69 {dimension_numbers = #tpu.dot_dimension_numbers<[1], [0], [0], [1], [0, 0, 1, 1], [], []>} : vector<192x128xf32>, vector<128x128xf32>, vector<192x128xf32> -> vector<192x128xf32>
    %84 = arith.addf %75, %83 : vector<192x128xf32>
    %85 = vector.shape_cast %84 : vector<192x128xf32> to vector<12x16x128xf32>
    %c0_70 = arith.constant 0 : index
    %c0_71 = arith.constant 0 : index
    %c0_72 = arith.constant 0 : index
    %c0_73 = arith.constant 0 : index
    %86 = vector.load %arg5[%c0_70, %c0_71, %c0_72, %c0_73] : memref<1x12x16x128xf32, #tpu.memory_space<vmem>>, vector<1x12x16x128xf32>
    %87 = vector.shape_cast %86 : vector<1x12x16x128xf32> to vector<12x16x128xf32>
    %88 = vector.shape_cast %85 : vector<12x16x128xf32> to vector<1x12x16x128xf32>
    tpu.vector_store %arg5[%c0_70, %c0_71, %c0_72, %c0_73], %88 {strides = array<i32>} : memref<1x12x16x128xf32, #tpu.memory_space<vmem>>, vector<1x12x16x128xf32>,
    return
  }
  func.func @transform_0(%arg0: i32, %arg1: i32) -> (i32, i32, i32, i32, i32) {
    %c0_i32 = arith.constant 0 : i32
    %c0_i32_0 = arith.constant 0 : i32
    %c0_i32_1 = arith.constant 0 : i32
    %c0_i32_2 = arith.constant 0 : i32
    %c0_i32_3 = arith.constant 0 : i32
    return %arg0, %c0_i32, %c0_i32_0, %c0_i32_1, %c0_i32_2 : i32, i32, i32, i32, i32
  }
  func.func @transform_1(%arg0: i32, %arg1: i32) -> (i32, i32, i32) {
    %c0_i32 = arith.constant 0 : i32
    %c0_i32_0 = arith.constant 0 : i32
    %c0_i32_1 = arith.constant 0 : i32
    %c0_i32_2 = arith.constant 0 : i32
    return %c0_i32, %c0_i32_0, %c0_i32_1 : i32, i32, i32
  }
  func.func @transform_2(%arg0: i32, %arg1: i32) -> (i32, i32) {
    %c0_i32 = arith.constant 0 : i32
    %c0_i32_0 = arith.constant 0 : i32
    %c0_i32_1 = arith.constant 0 : i32
    return %c0_i32, %c0_i32_0 : i32, i32
  }
  func.func @transform_3(%arg0: i32, %arg1: i32) -> (i32, i32, i32, i32) {
    %c0_i32 = arith.constant 0 : i32
    %c0_i32_0 = arith.constant 0 : i32
    %c0_i32_1 = arith.constant 0 : i32
    return %arg0, %arg1, %c0_i32, %c0_i32_0 : i32, i32, i32, i32
  }
}

</mosaic_0001>

<llo_original>
// kernel: tpu_custom_call.1
$region0: #{tpu_custom_call.1}
  #allocation0 [shape = 'u32[]', space=smem, size = 0x4, offset = 0x4, fixed_abs, tag = 'smem constant byte address 0x4 - core index']
  #allocation1 [shape = 'u32[144,128]{1,0:T(1,128)}', space=vmem, size = 0x12000, scoped, tag = 'internal scratch']
  %s0 = inlined_call_operand.hbm [shape: f32[2,1,26,24,128], index: 0, kind: input, shape index: {}]
  %s1 = inlined_call_operand.hbm [shape: f32[9,128,128], index: 1, kind: input, shape index: {}]
  %s2 = inlined_call_operand.vmem [shape: f32[1,128], index: 2, kind: input, shape index: {}]
  %s3 = inlined_call_operand.hbm [shape: f32[2,24,16,128], index: 3, kind: output, shape index: {}]
  %s4 = sld [smem:[#allocation0]]
  $region53: #{tpu_custom_call.1} parent=0
    _
  %s6 = ssub.s32 1, %s4
  %s7 = scalar_select 0, %s6, %s4
  $region1: #{tpu_custom_call.1} parent=0
    #allocation2 [shape = 'u8[638976]{0}', space=vmem, size = 0x9c000, scoped, tag = 'input window, operand 0']
    #allocation3 [shape = 's32[2]{0}', space=sflag, size = 0x8, scoped, tag = 'scoped memory for tpu_custom_call.1']
    #allocation4 [shape = 's32[2]{0}', space=sflag, size = 0x8, scoped, tag = 'scoped memory for tpu_custom_call.1']
    #allocation5 [shape = 'u8[589824]{0}', space=vmem, size = 0x90000, scoped, tag = 'input window, operand 1, single buffered']
    #allocation6 [shape = 's32[1]{0}', space=sflag, size = 0x4, scoped, tag = 'scoped memory for tpu_custom_call.1']
    #allocation7 [shape = 'u8[196608]{0}', space=vmem, size = 0x30000, scoped, tag = 'output window, operand 0']
    %8 = vsyncpa [#allocation3], 0
    %s9 = scalar_lea.sflag [#allocation3], 1
    %10 = vsyncpa %s9, 0
    %11 = vsyncpa [#allocation6], 0
    %12 = vsyncpa [#allocation4], 0
    %s13 = scalar_lea.sflag [#allocation4], 1
    %14 = vsyncpa %s13, 0
    loop: start=0, step=1, limit=6
    $region2: #{tpu_custom_call.1} parent=1 // loop_pre_header
      _
    $region3: #{tpu_custom_call.1} parent=1 // loop_header
      %s16 = sphi 0, %s20
      %p17 = scmp.ge.s32.totalorder %s16, 6
      %s23 = sphi 0, %s35
      %s24 = sphi 0, %s31
      %s25 = sphi 0, %s23
      %s26 = sphi 0, %s24
      %s27 = sphi 0, %s25
      %s28 = sphi 0, %s26
      %s38 = sphi 0, %s40
      %s41 = sphi 0, %s38
      %s42 = sphi 0, %s41
      %s58 = sphi 0, %s42
      %s62 = sphi 0, %s62
      %s64 = sphi 0, %s62
      %s65 = sphi 0, %s64
      %s79 = sphi 0, %s65
      %s83 = sphi 0, %s83
      %s85 = sphi 0, %s83
      %s86 = sphi 0, %s85
      %s100 = sphi 0, %s86
      %s108 = sphi 0, %s110
      %s111 = sphi 0, %s108
      %s112 = sphi 0, %s111
      %s128 = sphi 0, %s112
    $region4: #{tpu_custom_call.1} parent=1 // loop_header_branch
      %19 = sbr.rel (%p17) target = $region8
    $region5: #{tpu_custom_call.1} parent=1 // loop_body
      %s21 = ssub.s32 %s16, 1
      %s22 = ssub.s32 %s16, 2
      %s29 = sadd.s32 1, %s24
      %p30 = scmp.ge.s32.totalorder %s29, 2
      %s31 = scalar_select %p30, 0, %s29
      %s32 = sadd.s32 1, %s23
      %s33 = scalar_select %p30, %s32, %s23
      %p34 = scmp.ge.s32.totalorder %s33, 2
      %s35 = scalar_select %p34, 0, %s33
      %s36 = ssub.s32 %s23, %s35
      %p37 = scmp.eq.s32.totalorder %s36, 0
      %s39 = sadd.s32 %s38, 1
      %s40 = scalar_select %p37, %s38, %s39
      %p43 = pneg %p37
      %p44 = scmp.eq.s32.totalorder %s16, 3
      %p45 = por %p43, %p44
      %p46 = scmp.ne.s32.totalorder %s38, %s41
      %p47 = scmp.eq.s32.totalorder %s16, 0
      %p48 = por %p46, %p47
      %p49 = scmp.ne.s32.totalorder %s38, %s41
      %p50 = scmp.eq.s32.totalorder %s21, 3
      %p51 = por %p49, %p50
      %p52 = scmp.ne.s32.totalorder %s41, %s42
      %p53 = scmp.eq.s32.totalorder %s21, 0
      %p54 = por %p52, %p53
      %p55 = scmp.ne.s32.totalorder %s41, %s42
      %p56 = scmp.eq.s32.totalorder %s22, 3
      %p57 = por %p55, %p56
      %p59 = scmp.ne.s32.totalorder %s42, %s58
      %p60 = scmp.eq.s32.totalorder %s22, 0
      %p61 = por %p59, %p60
      %s63 = sadd.s32 %s62, 1
      %p66 = scmp.eq.s32.totalorder %s16, 3
      %p67 = scmp.ne.s32.totalorder %s62, %s64
      %p68 = scmp.eq.s32.totalorder %s16, 0
      %p69 = por %p67, %p68
      %p70 = scmp.ne.s32.totalorder %s62, %s64
      %p71 = scmp.eq.s32.totalorder %s21, 3
      %p72 = por %p70, %p71
      %p73 = scmp.ne.s32.totalorder %s64, %s65
      %p74 = scmp.eq.s32.totalorder %s21, 0
      %p75 = por %p73, %p74
      %p76 = scmp.ne.s32.totalorder %s64, %s65
      %p77 = scmp.eq.s32.totalorder %s22, 3
      %p78 = por %p76, %p77
      %p80 = scmp.ne.s32.totalorder %s65, %s79
      %p81 = scmp.eq.s32.totalorder %s22, 0
      %p82 = por %p80, %p81
      %s84 = sadd.s32 %s83, 1
      %p87 = scmp.eq.s32.totalorder %s16, 3
      %p88 = scmp.ne.s32.totalorder %s83, %s85
      %p89 = scmp.eq.s32.totalorder %s16, 0
      %p90 = por %p88, %p89
      %p91 = scmp.ne.s32.totalorder %s83, %s85
      %p92 = scmp.eq.s32.totalorder %s21, 3
      %p93 = por %p91, %p92
      %p94 = scmp.ne.s32.totalorder %s85, %s86
      %p95 = scmp.eq.s32.totalorder %s21, 0
      %p96 = por %p94, %p95
      %p97 = scmp.ne.s32.totalorder %s85, %s86
      %p98 = scmp.eq.s32.totalorder %s22, 3
      %p99 = por %p97, %p98
      %p101 = scmp.ne.s32.totalorder %s86, %s100
      %p102 = scmp.eq.s32.totalorder %s22, 0
      %p103 = por %p101, %p102
      %s104 = ssub.s32 %s23, %s35
      %s105 = ssub.s32 %s24, %s31
      %s106 = sor.u32 %s104, %s105
      %p107 = scmp.eq.s32.totalorder %s106, 0
      %s109 = sadd.s32 %s108, 1
      %s110 = scalar_select %p107, %s108, %s109
      %p113 = pneg %p107
      %p114 = scmp.eq.s32.totalorder %s16, 3
      %p115 = por %p113, %p114
      %p116 = scmp.ne.s32.totalorder %s108, %s111
      %p117 = scmp.eq.s32.totalorder %s16, 0
      %p118 = por %p116, %p117
      %p119 = scmp.ne.s32.totalorder %s108, %s111
      %p120 = scmp.eq.s32.totalorder %s21, 3
      %p121 = por %p119, %p120
      %p122 = scmp.ne.s32.totalorder %s111, %s112
      %p123 = scmp.eq.s32.totalorder %s21, 0
      %p124 = por %p122, %p123
      %p125 = scmp.ne.s32.totalorder %s111, %s112
      %p126 = scmp.eq.s32.totalorder %s22, 3
      %p127 = por %p125, %p126
      %p129 = scmp.ne.s32.totalorder %s112, %s128
      %p130 = scmp.eq.s32.totalorder %s22, 0
      %p131 = por %p129, %p130
      %p132 = scmp.le.s32.totalorder 1, %s16
      %p133 = scmp.lt.s32.totalorder %s16, 5
      %p134 = pnand %p132, %p133
      %p135 = pneg %p134
      // Predicated region
      $region9: #{tpu_custom_call.1} parent=5 // pred_check
        _
      $region10: #{tpu_custom_call.1} parent=5 // pred_check_branch
        %137 = sbr.rel (%p134) target = $region12
      $region11: #{tpu_custom_call.1} parent=5 // pred_region
        %s138 = ssub.s32 %s16, 1
        // Predicated region
        $region13: #{tpu_custom_call.1} parent=11 // pred_check
          %p139 = pneg %p75
        $region14: #{tpu_custom_call.1} parent=11 // pred_check_branch
          %141 = sbr.rel (%p139) target = $region16
        $region15: #{tpu_custom_call.1} parent=11 // pred_region
          %s143 = ssub.s32 18432, 18432
          %144 = vsyncadd [#allocation6], %s143
          %s145 = sshll.u32 [#allocation5], 4
          %s146 = int_to_ptr.vmem [resolvable:$true] %s145
          %151 = dma.hbm_to_vmem [thread:$0]  %s1, 18432, %s146, [#allocation6], 128, 128, 8
        $region16: #{tpu_custom_call.1} parent=11 // pred_fallthru
          _
        // Predicated region
        $region17: #{tpu_custom_call.1} parent=11 // pred_check
          %p152 = pneg %p96
        $region18: #{tpu_custom_call.1} parent=11 // pred_check_branch
          %154 = sbr.rel (%p152) target = $region20
        $region19: #{tpu_custom_call.1} parent=11 // pred_region
          _
        $region20: #{tpu_custom_call.1} parent=11 // pred_fallthru
          _
      $region12: #{tpu_custom_call.1} parent=5 // pred_fallthru
        _
      %p155 = scmp.lt.s32.totalorder %s16, 4
      // Predicated region
      $region21: #{tpu_custom_call.1} parent=5 // pred_check
        %p156 = pneg %p155
      $region22: #{tpu_custom_call.1} parent=5 // pred_check_branch
        %158 = sbr.rel (%p156) target = $region24
      $region23: #{tpu_custom_call.1} parent=5 // pred_region
        // Predicated region
        $region25: #{tpu_custom_call.1} parent=23 // pred_check
          %p159 = pneg %p48
        $region26: #{tpu_custom_call.1} parent=23 // pred_check_branch
          %161 = sbr.rel (%p159) target = $region28
        $region27: #{tpu_custom_call.1} parent=23 // pred_region
          %s162 = sand.u32 %s38, 1
          %s163 = scalar_lea.sflag [#allocation3], %s162
          %s164 = sand.u32 %s38, 1
          %s165 = smul.addr %s164, 624
          %s166 = scalar_lea.vmem [#allocation2], %s165
          %s168 = ssub.s32 9984, 9984
          %169 = vsyncadd %s163, %s168
          %s170 = smul.addr %s23, 78
          %s171 = smul.addr %s170, 128
          %s172 = scalar_lea.hbm %s0, %s171
          %s173 = sshll.u32 %s166, 4
          %s174 = int_to_ptr.vmem [resolvable:$true] %s173
          %179 = dma.hbm_to_vmem [thread:$0]  %s172, 9984, %s174, %s163, 128, 128, 8
        $region28: #{tpu_custom_call.1} parent=23 // pred_fallthru
          _
      $region24: #{tpu_custom_call.1} parent=5 // pred_fallthru
        _
      %p180 = scmp.le.s32.totalorder 1, %s16
      %p181 = scmp.lt.s32.totalorder %s16, 5
      %p182 = pnand %p180, %p181
      %p183 = pneg %p182
      // Predicated region
      $region29: #{tpu_custom_call.1} parent=5 // pred_check
        _
      $region30: #{tpu_custom_call.1} parent=5 // pred_check_branch
        %185 = sbr.rel (%p182) target = $region32
      $region31: #{tpu_custom_call.1} parent=5 // pred_region
        %s186 = ssub.s32 %s16, 1
        %s187 = sand.u32 %s41, 1
        %s188 = scalar_lea.sflag [#allocation3], %s187
        %s189 = sand.u32 %s41, 1
        %s190 = smul.addr %s189, 624
        %s191 = scalar_lea.vmem [#allocation2], %s190
        // Predicated region
        $region33: #{tpu_custom_call.1} parent=31 // pred_check
          %p192 = pneg %p54
        $region34: #{tpu_custom_call.1} parent=31 // pred_check_branch
          %194 = sbr.rel (%p192) target = $region36
        $region35: #{tpu_custom_call.1} parent=31 // pred_region
          %195 = dma.done %s188, 9984
        $region36: #{tpu_custom_call.1} parent=31 // pred_fallthru
          _
        // Predicated region
        $region37: #{tpu_custom_call.1} parent=31 // pred_check
          %p196 = pneg %p75
        $region38: #{tpu_custom_call.1} parent=31 // pred_check_branch
          %198 = sbr.rel (%p196) target = $region40
        $region39: #{tpu_custom_call.1} parent=31 // pred_region
          %199 = dma.done [#allocation6], 18432
        $region40: #{tpu_custom_call.1} parent=31 // pred_fallthru
          _
        %s200 = sand.u32 %s41, 1
        %s201 = scalar_lea.sflag [#allocation3], %s200
        %s202 = sand.u32 %s41, 1
        %s203 = smul.addr %s202, 624
        %s204 = scalar_lea.vmem [#allocation2], %s203
        %p205 = pneg %p54
        %p206 = pneg %p51
        %p207 = pneg %p75
        %p208 = pneg %p72
        %p209 = pneg %p96
        %p210 = pneg %p93
        %p211 = pneg %p124
        %p212 = pneg %p121
        %s213 = sand.u32 %s111, 1
        %s214 = scalar_lea.sflag [#allocation4], %s213
        %s215 = sand.u32 %s111, 1
        %s216 = smul.addr %s215, 192
        %s217 = scalar_lea.vmem [#allocation7], %s216
        %s218 = smul.u32 12, %s26
        %s219 = smul.u32 %s26, 12
        %v220 = vld [vmem:[%s2] sm:$0x1]
        %v222 = vlaneseq
        %v223 = vshrl.u32 %v222, 7
        %v224 = vsub.s32 0, %v223
        %v225 = vrot.slane %v220, %v224
        %s227 = smul.u32 %s219, 24
        %s228 = scalar_lea.vmem %s191, %s227 [#allocation2]
        %v229 = vld [vmem:[%s228] sm:$0xff]
        %v230 = vld [vmem:[%s228 + $0x8] sm:$0xff]
        %v231 = vld [vmem:[%s228 + $0x18] sm:$0xff]
        %v232 = vld [vmem:[%s228 + $0x20] sm:$0xff]
        %v233 = vld [vmem:[%s228 + $0x30] sm:$0xff]
        %v234 = vld [vmem:[%s228 + $0x38] sm:$0xff]
        %v235 = vld [vmem:[%s228 + $0x48] sm:$0xff]
        %v236 = vld [vmem:[%s228 + $0x50] sm:$0xff]
        %v237 = vld [vmem:[%s228 + $0x60] sm:$0xff]
        %v238 = vld [vmem:[%s228 + $0x68] sm:$0xff]
        %v239 = vld [vmem:[%s228 + $0x78] sm:$0xff]
        %v240 = vld [vmem:[%s228 + $0x80] sm:$0xff]
        %v241 = vld [vmem:[%s228 + $0x90] sm:$0xff]
        %v242 = vld [vmem:[%s228 + $0x98] sm:$0xff]
        %v243 = vld [vmem:[%s228 + $0xa8] sm:$0xff]
        %v244 = vld [vmem:[%s228 + $0xb0] sm:$0xff]
        %v245 = vld [vmem:[%s228 + $0xc0] sm:$0xff]
        %v246 = vld [vmem:[%s228 + $0xc8] sm:$0xff]
        %v247 = vld [vmem:[%s228 + $0xd8] sm:$0xff]
        %v248 = vld [vmem:[%s228 + $0xe0] sm:$0xff]
        %v249 = vld [vmem:[%s228 + $0xf0] sm:$0xff]
        %v250 = vld [vmem:[%s228 + $0xf8] sm:$0xff]
        %v251 = vld [vmem:[%s228 + $0x108] sm:$0xff]
        %v252 = vld [vmem:[%s228 + $0x110] sm:$0xff]
        %v253 = vld [vmem:[#allocation5] sm:$0xff]
        %v254 = vld [vmem:[#allocation5 + $0x8] sm:$0xff]
        %v255 = vld [vmem:[#allocation5 + $0x10] sm:$0xff]
        %v256 = vld [vmem:[#allocation5 + $0x18] sm:$0xff]
        %v257 = vld [vmem:[#allocation5 + $0x20] sm:$0xff]
        %v258 = vld [vmem:[#allocation5 + $0x28] sm:$0xff]
        %v259 = vld [vmem:[#allocation5 + $0x30] sm:$0xff]
        %v260 = vld [vmem:[#allocation5 + $0x38] sm:$0xff]
        %v261 = vld [vmem:[#allocation5 + $0x40] sm:$0xff]
        %v262 = vld [vmem:[#allocation5 + $0x48] sm:$0xff]
        %v263 = vld [vmem:[#allocation5 + $0x50] sm:$0xff]
        %v264 = vld [vmem:[#allocation5 + $0x58] sm:$0xff]
        %v265 = vld [vmem:[#allocation5 + $0x60] sm:$0xff]
        %v266 = vld [vmem:[#allocation5 + $0x68] sm:$0xff]
        %v267 = vld [vmem:[#allocation5 + $0x70] sm:$0xff]
        %v268 = vld [vmem:[#allocation5 + $0x78] sm:$0xff]
        %269 = vmatprep.subr.mxu0 0.0
        %270 = vmatpush1.msra.mxu0 %v253
        %271 = vmatprep.subr.mxu0 0.0
        %272 = vmatpush1.msra.mxu0 %v254
        %273 = vmatprep.subr.mxu0 0.0
        %274 = vmatpush1.msra.mxu0 %v255
        %275 = vmatprep.subr.mxu0 0.0
        %276 = vmatpush1.msra.mxu0 %v256
        %277 = vmatprep.subr.mxu0 0.0
        %278 = vmatpush1.msra.mxu0 %v257
        %279 = vmatprep.subr.mxu0 0.0
        %280 = vmatpush1.msra.mxu0 %v258
        %281 = vmatprep.subr.mxu0 0.0
        %282 = vmatpush1.msra.mxu0 %v259
        %283 = vmatprep.subr.mxu0 0.0
        %284 = vmatpush1.msra.mxu0 %v260
        %285 = vmatprep.subr.mxu0 0.0
        %286 = vmatpush1.msra.mxu0 %v261
        %287 = vmatprep.subr.mxu0 0.0
        %288 = vmatpush1.msra.mxu0 %v262
        %289 = vmatprep.subr.mxu0 0.0
        %290 = vmatpush1.msra.mxu0 %v263
        %291 = vmatprep.subr.mxu0 0.0
        %292 = vmatpush1.msra.mxu0 %v264
        %293 = vmatprep.subr.mxu0 0.0
        %294 = vmatpush1.msra.mxu0 %v265
        %295 = vmatprep.subr.mxu0 0.0
        %296 = vmatpush1.msra.mxu0 %v266
        %297 = vmatprep.subr.mxu0 0.0
        %298 = vmatpush1.msra.mxu0 %v267
        %299 = vmatprep.subr.mxu0 0.0
        %300 = vmatpush1.msra.mxu0 %v268
        %301 = vmatprep.subr.mxu0 0.0
        %302 = vmatpush1.msra.mxu0 0.0
        %303 = vmatprep.subr.mxu0 0.0
        %304 = vmatpush1.msra.mxu0 0.0
        %305 = vmatprep.subr.mxu0 0.0
        %306 = vmatpush1.msra.mxu0 0.0
        %307 = vmatprep.subr.mxu0 0.0
        %308 = vmatpush1.msra.mxu0 0.0
        %309 = vmatprep.subr.mxu0 0.0
        %310 = vmatpush1.msra.mxu0 0.0
        %311 = vmatprep.subr.mxu0 0.0
        %312 = vmatpush1.msra.mxu0 0.0
        %313 = vmatprep.subr.mxu0 0.0
        %314 = vmatpush1.msra.mxu0 0.0
        %315 = vmatprep.subr.mxu0 0.0
        %316 = vmatpush1.msra.mxu0 0.0
        %317 = vmatprep.subr.mxu0 0.0
        %318 = vmatpush1.msra.mxu0 0.0
        %319 = vmatprep.subr.mxu0 0.0
        %320 = vmatpush1.msra.mxu0 0.0
        %321 = vmatprep.subr.mxu0 0.0
        %322 = vmatpush1.msra.mxu0 0.0
        %323 = vmatprep.subr.mxu0 0.0
        %324 = vmatpush1.msra.mxu0 0.0
        %325 = vmatprep.subr.mxu0 0.0
        %326 = vmatpush1.msra.mxu0 0.0
        %327 = vmatprep.subr.mxu0 0.0
        %328 = vmatpush1.msra.mxu0 0.0
        %329 = vmatprep.subr.mxu0 0.0
        %330 = vmatpush1.msra.mxu0 0.0
        %331 = vmatprep.subr.mxu0 0.0
        %332 = vmatpush1.msra.mxu0 0.0
        %333 = vmatprep.mubr.f32.mxu0 0.0
        %334 = vmatmul.mubr.f32.gmra.mrb[0].mxu0 %v229
        %v335 = vpop.f32.mrb[0].mxu0
        %v336 = vadd.f32 0.0, %v335
        %v337 = vpop.f32.mrb[0].mxu0
        %338 = vmatprep.mubr.f32.mxu0 0.0
        %339 = vmatmul.mubr.f32.gmra.mrb[0].mxu0 %v230
        %v340 = vpop.f32.mrb[0].mxu0
        %v341 = vadd.f32 0.0, %v340
        %v342 = vpop.f32.mrb[0].mxu0
        %343 = vmatprep.mubr.f32.mxu0 0.0
        %344 = vmatmul.mubr.f32.gmra.mrb[0].mxu0 %v231
        %v345 = vpop.f32.mrb[0].mxu0
        %v346 = vadd.f32 0.0, %v345
        %v347 = vpop.f32.mrb[0].mxu0
        %348 = vmatprep.mubr.f32.mxu0 0.0
        %349 = vmatmul.mubr.f32.gmra.mrb[0].mxu0 %v232
        %v350 = vpop.f32.mrb[0].mxu0
        %v351 = vadd.f32 0.0, %v350
        %v352 = vpop.f32.mrb[0].mxu0
        %353 = vmatprep.mubr.f32.mxu0 0.0
        %354 = vmatmul.mubr.f32.gmra.mrb[0].mxu0 %v233
        %v355 = vpop.f32.mrb[0].mxu0
        %v356 = vadd.f32 0.0, %v355
        %v357 = vpop.f32.mrb[0].mxu0
        %358 = vmatprep.mubr.f32.mxu0 0.0
        %359 = vmatmul.mubr.f32.gmra.mrb[0].mxu0 %v234
        %v360 = vpop.f32.mrb[0].mxu0
        %v361 = vadd.f32 0.0, %v360
        %v362 = vpop.f32.mrb[0].mxu0
        %363 = vmatprep.mubr.f32.mxu0 0.0
        %364 = vmatmul.mubr.f32.gmra.mrb[0].mxu0 %v235
        %v365 = vpop.f32.mrb[0].mxu0
        %v366 = vadd.f32 0.0, %v365
        %v367 = vpop.f32.mrb[0].mxu0
        %368 = vmatprep.mubr.f32.mxu0 0.0
        %369 = vmatmul.mubr.f32.gmra.mrb[0].mxu0 %v236
        %v370 = vpop.f32.mrb[0].mxu0
        %v371 = vadd.f32 0.0, %v370
        %v372 = vpop.f32.mrb[0].mxu0
        %373 = vmatprep.mubr.f32.mxu0 0.0
        %374 = vmatmul.mubr.f32.gmra.mrb[0].mxu0 %v237
        %v375 = vpop.f32.mrb[0].mxu0
        %v376 = vadd.f32 0.0, %v375
        %v377 = vpop.f32.mrb[0].mxu0
        %378 = vmatprep.mubr.f32.mxu0 0.0
        %379 = vmatmul.mubr.f32.gmra.mrb[0].mxu0 %v238
        %v380 = vpop.f32.mrb[0].mxu0
        %v381 = vadd.f32 0.0, %v380
        %v382 = vpop.f32.mrb[0].mxu0
        %383 = vmatprep.mubr.f32.mxu0 0.0
        %384 = vmatmul.mubr.f32.gmra.mrb[0].mxu0 %v239
        %v385 = vpop.f32.mrb[0].mxu0
        %v386 = vadd.f32 0.0, %v385
        %v387 = vpop.f32.mrb[0].mxu0
        %388 = vmatprep.mubr.f32.mxu0 0.0
        %389 = vmatmul.mubr.f32.gmra.mrb[0].mxu0 %v240
        %v390 = vpop.f32.mrb[0].mxu0
        %v391 = vadd.f32 0.0, %v390
        %v392 = vpop.f32.mrb[0].mxu0
        %393 = vmatprep.mubr.f32.mxu0 0.0
        %394 = vmatmul.mubr.f32.gmra.mrb[0].mxu0 %v241
        %v395 = vpop.f32.mrb[0].mxu0
        %v396 = vadd.f32 0.0, %v395
        %v397 = vpop.f32.mrb[0].mxu0
        %398 = vmatprep.mubr.f32.mxu0 0.0
        %399 = vmatmul.mubr.f32.gmra.mrb[0].mxu0 %v242
        %v400 = vpop.f32.mrb[0].mxu0
        %v401 = vadd.f32 0.0, %v400
        %v402 = vpop.f32.mrb[0].mxu0
        %403 = vmatprep.mubr.f32.mxu0 0.0
        %404 = vmatmul.mubr.f32.gmra.mrb[0].mxu0 %v243
        %v405 = vpop.f32.mrb[0].mxu0
        %v406 = vadd.f32 0.0, %v405
        %v407 = vpop.f32.mrb[0].mxu0
        %408 = vmatprep.mubr.f32.mxu0 0.0
        %409 = vmatmul.mubr.f32.gmra.mrb[0].mxu0 %v244
        %v410 = vpop.f32.mrb[0].mxu0
        %v411 = vadd.f32 0.0, %v410
        %v412 = vpop.f32.mrb[0].mxu0
        %413 = vmatprep.mubr.f32.mxu0 0.0
        %414 = vmatmul.mubr.f32.gmra.mrb[0].mxu0 %v245
        %v415 = vpop.f32.mrb[0].mxu0
        %v416 = vadd.f32 0.0, %v415
        %v417 = vpop.f32.mrb[0].mxu0
        %418 = vmatprep.mubr.f32.mxu0 0.0
        %419 = vmatmul.mubr.f32.gmra.mrb[0].mxu0 %v246
        %v420 = vpop.f32.mrb[0].mxu0
        %v421 = vadd.f32 0.0, %v420
        %v422 = vpop.f32.mrb[0].mxu0
        %423 = vmatprep.mubr.f32.mxu0 0.0
        %424 = vmatmul.mubr.f32.gmra.mrb[0].mxu0 %v247
        %v425 = vpop.f32.mrb[0].mxu0
        %v426 = vadd.f32 0.0, %v425
        %v427 = vpop.f32.mrb[0].mxu0
        %428 = vmatprep.mubr.f32.mxu0 0.0
        %429 = vmatmul.mubr.f32.gmra.mrb[0].mxu0 %v248
        %v430 = vpop.f32.mrb[0].mxu0
        %v431 = vadd.f32 0.0, %v430
        %v432 = vpop.f32.mrb[0].mxu0
        %433 = vmatprep.mubr.f32.mxu0 0.0
        %434 = vmatmul.mubr.f32.gmra.mrb[0].mxu0 %v249
        %v435 = vpop.f32.mrb[0].mxu0
        %v436 = vadd.f32 0.0, %v435
        %v437 = vpop.f32.mrb[0].mxu0
        %438 = vmatprep.mubr.f32.mxu0 0.0
        %439 = vmatmul.mubr.f32.gmra.mrb[0].mxu0 %v250
        %v440 = vpop.f32.mrb[0].mxu0
        %v441 = vadd.f32 0.0, %v440
        %v442 = vpop.f32.mrb[0].mxu0
        %443 = vmatprep.mubr.f32.mxu0 0.0
        %444 = vmatmul.mubr.f32.gmra.mrb[0].mxu0 %v251
        %v445 = vpop.f32.mrb[0].mxu0
        %v446 = vadd.f32 0.0, %v445
        %v447 = vpop.f32.mrb[0].mxu0
        %448 = vmatprep.mubr.f32.mxu0 0.0
        %449 = vmatmul.mubr.f32.gmra.mrb[0].mxu0 %v252
        %v450 = vpop.f32.mrb[0].mxu0
        %v451 = vadd.f32 0.0, %v450
        %v452 = vpop.f32.mrb[0].mxu0
        %453 = vdwg.mxu0
        %v454 = vadd.f32 %v225, %v336
        %v455 = vadd.f32 %v225, %v341
        %v456 = vadd.f32 %v225, %v346
        %v457 = vadd.f32 %v225, %v351
        %v458 = vadd.f32 %v225, %v356
        %v459 = vadd.f32 %v225, %v361
        %v460 = vadd.f32 %v225, %v366
        %v461 = vadd.f32 %v225, %v371
        %v462 = vadd.f32 %v225, %v376
        %v463 = vadd.f32 %v225, %v381
        %v464 = vadd.f32 %v225, %v386
        %v465 = vadd.f32 %v225, %v391
        %v466 = vadd.f32 %v225, %v396
        %v467 = vadd.f32 %v225, %v401
        %v468 = vadd.f32 %v225, %v406
        %v469 = vadd.f32 %v225, %v411
        %v470 = vadd.f32 %v225, %v416
        %v471 = vadd.f32 %v225, %v421
        %v472 = vadd.f32 %v225, %v426
        %v473 = vadd.f32 %v225, %v431
        %v474 = vadd.f32 %v225, %v436
        %v475 = vadd.f32 %v225, %v441
        %v476 = vadd.f32 %v225, %v446
        %v477 = vadd.f32 %v225, %v451
        %v478 = vld [vmem:[%s228 + $0x1] sm:$0xff]
        %v479 = vld [vmem:[%s228 + $0x9] sm:$0xff]
        %v480 = vld [vmem:[%s228 + $0x19] sm:$0xff]
        %v481 = vld [vmem:[%s228 + $0x21] sm:$0xff]
        %v482 = vld [vmem:[%s228 + $0x31] sm:$0xff]
        %v483 = vld [vmem:[%s228 + $0x39] sm:$0xff]
        %v484 = vld [vmem:[%s228 + $0x49] sm:$0xff]
        %v485 = vld [vmem:[%s228 + $0x51] sm:$0xff]
        %v486 = vld [vmem:[%s228 + $0x61] sm:$0xff]
        %v487 = vld [vmem:[%s228 + $0x69] sm:$0xff]
        %v488 = vld [vmem:[%s228 + $0x79] sm:$0xff]
        %v489 = vld [vmem:[%s228 + $0x81] sm:$0xff]
        %v490 = vld [vmem:[%s228 + $0x91] sm:$0xff]
        %v491 = vld [vmem:[%s228 + $0x99] sm:$0xff]
        %v492 = vld [vmem:[%s228 + $0xa9] sm:$0xff]
        %v493 = vld [vmem:[%s228 + $0xb1] sm:$0xff]
        %v494 = vld [vmem:[%s228 + $0xc1] sm:$0xff]
        %v495 = vld [vmem:[%s228 + $0xc9] sm:$0xff]
        %v496 = vld [vmem:[%s228 + $0xd9] sm:$0xff]
        %v497 = vld [vmem:[%s228 + $0xe1] sm:$0xff]
        %v498 = vld [vmem:[%s228 + $0xf1] sm:$0xff]
        %v499 = vld [vmem:[%s228 + $0xf9] sm:$0xff]
        %v500 = vld [vmem:[%s228 + $0x109] sm:$0xff]
        %v501 = vld [vmem:[%s228 + $0x111] sm:$0xff]
        %s502 = scalar_lea.vmem [#allocation5], 128
        %v503 = vld [vmem:[%s502] sm:$0xff]
        %v504 = vld [vmem:[%s502 + $0x8] sm:$0xff]
        %v505 = vld [vmem:[%s502 + $0x10] sm:$0xff]
        %v506 = vld [vmem:[%s502 + $0x18] sm:$0xff]
        %v507 = vld [vmem:[%s502 + $0x20] sm:$0xff]
        %v508 = vld [vmem:[%s502 + $0x28] sm:$0xff]
        %v509 = vld [vmem:[%s502 + $0x30] sm:$0xff]
        %v510 = vld [vmem:[%s502 + $0x38] sm:$0xff]
        %v511 = vld [vmem:[%s502 + $0x40] sm:$0xff]
        %v512 = vld [vmem:[%s502 + $0x48] sm:$0xff]
        %v513 = vld [vmem:[%s502 + $0x50] sm:$0xff]
        %v514 = vld [vmem:[%s502 + $0x58] sm:$0xff]
        %v515 = vld [vmem:[%s502 + $0x60] sm:$0xff]
        %v516 = vld [vmem:[%s502 + $0x68] sm:$0xff]
        %v517 = vld [vmem:[%s502 + $0x70] sm:$0xff]
        %v518 = vld [vmem:[%s502 + $0x78] sm:$0xff]
        %519 = vmatprep.subr.mxu0 0.0
        %520 = vmatpush1.msra.mxu0 %v503
        %521 = vmatprep.subr.mxu0 0.0
        %522 = vmatpush1.msra.mxu0 %v504
        %523 = vmatprep.subr.mxu0 0.0
        %524 = vmatpush1.msra.mxu0 %v505
        %525 = vmatprep.subr.mxu0 0.0
        %526 = vmatpush1.msra.mxu0 %v506
        %527 = vmatprep.subr.mxu0 0.0
        %528 = vmatpush1.msra.mxu0 %v507
        %529 = vmatprep.subr.mxu0 0.0
        %530 = vmatpush1.msra.mxu0 %v508
        %531 = vmatprep.subr.mxu0 0.0
        %532 = vmatpush1.msra.mxu0 %v509
        %533 = vmatprep.subr.mxu0 0.0
        %534 = vmatpush1.msra.mxu0 %v510
        %535 = vmatprep.subr.mxu0 0.0
        %536 = vmatpush1.msra.mxu0 %v511
        %537 = vmatprep.subr.mxu0 0.0
        %538 = vmatpush1.msra.mxu0 %v512
        %539 = vmatprep.subr.mxu0 0.0
        %540 = vmatpush1.msra.mxu0 %v513
        %541 = vmatprep.subr.mxu0 0.0
        %542 = vmatpush1.msra.mxu0 %v514
        %543 = vmatprep.subr.mxu0 0.0
        %544 = vmatpush1.msra.mxu0 %v515
        %545 = vmatprep.subr.mxu0 0.0
        %546 = vmatpush1.msra.mxu0 %v516
        %547 = vmatprep.subr.mxu0 0.0
        %548 = vmatpush1.msra.mxu0 %v517
        %549 = vmatprep.subr.mxu0 0.0
        %550 = vmatpush1.msra.mxu0 %v518
        %551 = vmatprep.subr.mxu0 0.0
        %552 = vmatpush1.msra.mxu0 0.0
        %553 = vmatprep.subr.mxu0 0.0
        %554 = vmatpush1.msra.mxu0 0.0
        %555 = vmatprep.subr.mxu0 0.0
        %556 = vmatpush1.msra.mxu0 0.0
        %557 = vmatprep.subr.mxu0 0.0
        %558 = vmatpush1.msra.mxu0 0.0
        %559 = vmatprep.subr.mxu0 0.0
        %560 = vmatpush1.msra.mxu0 0.0
        %561 = vmatprep.subr.mxu0 0.0
        %562 = vmatpush1.msra.mxu0 0.0
        %563 = vmatprep.subr.mxu0 0.0
        %564 = vmatpush1.msra.mxu0 0.0
        %565 = vmatprep.subr.mxu0 0.0
        %566 = vmatpush1.msra.mxu0 0.0
        %567 = vmatprep.subr.mxu0 0.0
        %568 = vmatpush1.msra.mxu0 0.0
        %569 = vmatprep.subr.mxu0 0.0
        %570 = vmatpush1.msra.mxu0 0.0
        %571 = vmatprep.subr.mxu0 0.0
        %572 = vmatpush1.msra.mxu0 0.0
        %573 = vmatprep.subr.mxu0 0.0
        %574 = vmatpush1.msra.mxu0 0.0
        %575 = vmatprep.subr.mxu0 0.0
        %576 = vmatpush1.msra.mxu0 0.0
        %577 = vmatprep.subr.mxu0 0.0
        %578 = vmatpush1.msra.mxu0 0.0
        %579 = vmatprep.subr.mxu0 0.0
        %580 = vmatpush1.msra.mxu0 0.0
        %581 = vmatprep.subr.mxu0 0.0
        %582 = vmatpush1.msra.mxu0 0.0
        %583 = vmatprep.mubr.f32.mxu0 0.0
        %584 = vmatmul.mubr.f32.gmra.mrb[0].mxu0 %v478
        %v585 = vpop.f32.mrb[0].mxu0
        %v586 = vadd.f32 0.0, %v585
        %v587 = vpop.f32.mrb[0].mxu0
        %588 = vmatprep.mubr.f32.mxu0 0.0
        %589 = vmatmul.mubr.f32.gmra.mrb[0].mxu0 %v479
        %v590 = vpop.f32.mrb[0].mxu0
        %v591 = vadd.f32 0.0, %v590
        %v592 = vpop.f32.mrb[0].mxu0
        %593 = vmatprep.mubr.f32.mxu0 0.0
        %594 = vmatmul.mubr.f32.gmra.mrb[0].mxu0 %v480
        %v595 = vpop.f32.mrb[0].mxu0
        %v596 = vadd.f32 0.0, %v595
        %v597 = vpop.f32.mrb[0].mxu0
        %598 = vmatprep.mubr.f32.mxu0 0.0
        %599 = vmatmul.mubr.f32.gmra.mrb[0].mxu0 %v481
        %v600 = vpop.f32.mrb[0].mxu0
        %v601 = vadd.f32 0.0, %v600
        %v602 = vpop.f32.mrb[0].mxu0
        %603 = vmatprep.mubr.f32.mxu0 0.0
        %604 = vmatmul.mubr.f32.gmra.mrb[0].mxu0 %v482
        %v605 = vpop.f32.mrb[0].mxu0
        %v606 = vadd.f32 0.0, %v605
        %v607 = vpop.f32.mrb[0].mxu0
        %608 = vmatprep.mubr.f32.mxu0 0.0
        %609 = vmatmul.mubr.f32.gmra.mrb[0].mxu0 %v483
        %v610 = vpop.f32.mrb[0].mxu0
        %v611 = vadd.f32 0.0, %v610
        %v612 = vpop.f32.mrb[0].mxu0
        %613 = vmatprep.mubr.f32.mxu0 0.0
        %614 = vmatmul.mubr.f32.gmra.mrb[0].mxu0 %v484
        %v615 = vpop.f32.mrb[0].mxu0
        %v616 = vadd.f32 0.0, %v615
        %v617 = vpop.f32.mrb[0].mxu0
        %618 = vmatprep.mubr.f32.mxu0 0.0
        %619 = vmatmul.mubr.f32.gmra.mrb[0].mxu0 %v485
        %v620 = vpop.f32.mrb[0].mxu0
        %v621 = vadd.f32 0.0, %v620
        %v622 = vpop.f32.mrb[0].mxu0
        %623 = vmatprep.mubr.f32.mxu0 0.0
        %624 = vmatmul.mubr.f32.gmra.mrb[0].mxu0 %v486
        %v625 = vpop.f32.mrb[0].mxu0
        %v626 = vadd.f32 0.0, %v625
        %v627 = vpop.f32.mrb[0].mxu0
        %628 = vmatprep.mubr.f32.mxu0 0.0
        %629 = vmatmul.mubr.f32.gmra.mrb[0].mxu0 %v487
        %v630 = vpop.f32.mrb[0].mxu0
        %v631 = vadd.f32 0.0, %v630
        %v632 = vpop.f32.mrb[0].mxu0
        %633 = vmatprep.mubr.f32.mxu0 0.0
        %634 = vmatmul.mubr.f32.gmra.mrb[0].mxu0 %v488
        %v635 = vpop.f32.mrb[0].mxu0
        %v636 = vadd.f32 0.0, %v635
        %v637 = vpop.f32.mrb[0].mxu0
        %638 = vmatprep.mubr.f32.mxu0 0.0
        %639 = vmatmul.mubr.f32.gmra.mrb[0].mxu0 %v489
        %v640 = vpop.f32.mrb[0].mxu0
        %v641 = vadd.f32 0.0, %v640
        %v642 = vpop.f32.mrb[0].mxu0
        %643 = vmatprep.mubr.f32.mxu0 0.0
        %644 = vmatmul.mubr.f32.gmra.mrb[0].mxu0 %v490
        %v645 = vpop.f32.mrb[0].mxu0
        %v646 = vadd.f32 0.0, %v645
        %v647 = vpop.f32.mrb[0].mxu0
        %648 = vmatprep.mubr.f32.mxu0 0.0
        %649 = vmatmul.mubr.f32.gmra.mrb[0].mxu0 %v491
        %v650 = vpop.f32.mrb[0].mxu0
        %v651 = vadd.f32 0.0, %v650
        %v652 = vpop.f32.mrb[0].mxu0
        %653 = vmatprep.mubr.f32.mxu0 0.0
        %654 = vmatmul.mubr.f32.gmra.mrb[0].mxu0 %v492
        %v655 = vpop.f32.mrb[0].mxu0
        %v656 = vadd.f32 0.0, %v655
        %v657 = vpop.f32.mrb[0].mxu0
        %658 = vmatprep.mubr.f32.mxu0 0.0
        %659 = vmatmul.mubr.f32.gmra.mrb[0].mxu0 %v493
        %v660 = vpop.f32.mrb[0].mxu0
        %v661 = vadd.f32 0.0, %v660
        %v662 = vpop.f32.mrb[0].mxu0
        %663 = vmatprep.mubr.f32.mxu0 0.0
        %664 = vmatmul.mubr.f32.gmra.mrb[0].mxu0 %v494
        %v665 = vpop.f32.mrb[0].mxu0
        %v666 = vadd.f32 0.0, %v665
        %v667 = vpop.f32.mrb[0].mxu0
        %668 = vmatprep.mubr.f32.mxu0 0.0
        %669 = vmatmul.mubr.f32.gmra.mrb[0].mxu0 %v495
        %v670 = vpop.f32.mrb[0].mxu0
        %v671 = vadd.f32 0.0, %v670
        %v672 = vpop.f32.mrb[0].mxu0
        %673 = vmatprep.mubr.f32.mxu0 0.0
        %674 = vmatmul.mubr.f32.gmra.mrb[0].mxu0 %v496
        %v675 = vpop.f32.mrb[0].mxu0
        %v676 = vadd.f32 0.0, %v675
        %v677 = vpop.f32.mrb[0].mxu0
        %678 = vmatprep.mubr.f32.mxu0 0.0
        %679 = vmatmul.mubr.f32.gmra.mrb[0].mxu0 %v497
        %v680 = vpop.f32.mrb[0].mxu0
        %v681 = vadd.f32 0.0, %v680
        %v682 = vpop.f32.mrb[0].mxu0
        %683 = vmatprep.mubr.f32.mxu0 0.0
        %684 = vmatmul.mubr.f32.gmra.mrb[0].mxu0 %v498
        %v685 = vpop.f32.mrb[0].mxu0
        %v686 = vadd.f32 0.0, %v685
        %v687 = vpop.f32.mrb[0].mxu0
        %688 = vmatprep.mubr.f32.mxu0 0.0
        %689 = vmatmul.mubr.f32.gmra.mrb[0].mxu0 %v499
        %v690 = vpop.f32.mrb[0].mxu0
        %v691 = vadd.f32 0.0, %v690
        %v692 = vpop.f32.mrb[0].mxu0
        %693 = vmatprep.mubr.f32.mxu0 0.0
        %694 = vmatmul.mubr.f32.gmra.mrb[0].mxu0 %v500
        %v695 = vpop.f32.mrb[0].mxu0
        %v696 = vadd.f32 0.0, %v695
        %v697 = vpop.f32.mrb[0].mxu0
        %698 = vmatprep.mubr.f32.mxu0 0.0
        %699 = vmatmul.mubr.f32.gmra.mrb[0].mxu0 %v501
        %v700 = vpop.f32.mrb[0].mxu0
        %v701 = vadd.f32 0.0, %v700
        %v702 = vpop.f32.mrb[0].mxu0
        %703 = vdwg.mxu0
        %v704 = vadd.f32 %v454, %v586
        %v705 = vadd.f32 %v455, %v591
        %v706 = vadd.f32 %v456, %v596
        %v707 = vadd.f32 %v457, %v601
        %v708 = vadd.f32 %v458, %v606
        %v709 = vadd.f32 %v459, %v611
        %v710 = vadd.f32 %v460, %v616
        %v711 = vadd.f32 %v461, %v621
        %v712 = vadd.f32 %v462, %v626
        %v713 = vadd.f32 %v463, %v631
        %v714 = vadd.f32 %v464, %v636
        %v715 = vadd.f32 %v465, %v641
        %v716 = vadd.f32 %v466, %v646
        %v717 = vadd.f32 %v467, %v651
        %v718 = vadd.f32 %v468, %v656
        %v719 = vadd.f32 %v469, %v661
        %v720 = vadd.f32 %v470, %v666
        %v721 = vadd.f32 %v471, %v671
        %v722 = vadd.f32 %v472, %v676
        %v723 = vadd.f32 %v473, %v681
        %v724 = vadd.f32 %v474, %v686
        %v725 = vadd.f32 %v475, %v691
        %v726 = vadd.f32 %v476, %v696
        %v727 = vadd.f32 %v477, %v701
        %v728 = vld [vmem:[%s228 + $0x2] sm:$0xff]
        %v729 = vld [vmem:[%s228 + $0xa] sm:$0xff]
        %v730 = vld [vmem:[%s228 + $0x1a] sm:$0xff]
        %v731 = vld [vmem:[%s228 + $0x22] sm:$0xff]
        %v732 = vld [vmem:[%s228 + $0x32] sm:$0xff]
        %v733 = vld [vmem:[%s228 + $0x3a] sm:$0xff]
        %v734 = vld [vmem:[%s228 + $0x4a] sm:$0xff]
        %v735 = vld [vmem:[%s228 + $0x52] sm:$0xff]
        %v736 = vld [vmem:[%s228 + $0x62] sm:$0xff]
        %v737 = vld [vmem:[%s228 + $0x6a] sm:$0xff]
        %v738 = vld [vmem:[%s228 + $0x7a] sm:$0xff]
        %v739 = vld [vmem:[%s228 + $0x82] sm:$0xff]
        %v740 = vld [vmem:[%s228 + $0x92] sm:$0xff]
        %v741 = vld [vmem:[%s228 + $0x9a] sm:$0xff]
        %v742 = vld [vmem:[%s228 + $0xaa] sm:$0xff]
        %v743 = vld [vmem:[%s228 + $0xb2] sm:$0xff]
        %v744 = vld [vmem:[%s228 + $0xc2] sm:$0xff]
        %v745 = vld [vmem:[%s228 + $0xca] sm:$0xff]
        %v746 = vld [vmem:[%s228 + $0xda] sm:$0xff]
        %v747 = vld [vmem:[%s228 + $0xe2] sm:$0xff]
        %v748 = vld [vmem:[%s228 + $0xf2] sm:$0xff]
        %v749 = vld [vmem:[%s228 + $0xfa] sm:$0xff]
        %v750 = vld [vmem:[%s228 + $0x10a] sm:$0xff]
        %v751 = vld [vmem:[%s228 + $0x112] sm:$0xff]
        %s752 = scalar_lea.vmem [#allocation5], 256
        %v753 = vld [vmem:[%s752] sm:$0xff]
        %v754 = vld [vmem:[%s752 + $0x8] sm:$0xff]
        %v755 = vld [vmem:[%s752 + $0x10] sm:$0xff]
        %v756 = vld [vmem:[%s752 + $0x18] sm:$0xff]
        %v757 = vld [vmem:[%s752 + $0x20] sm:$0xff]
        %v758 = vld [vmem:[%s752 + $0x28] sm:$0xff]
        %v759 = vld [vmem:[%s752 + $0x30] sm:$0xff]
        %v760 = vld [vmem:[%s752 + $0x38] sm:$0xff]
        %v761 = vld [vmem:[%s752 + $0x40] sm:$0xff]
        %v762 = vld [vmem:[%s752 + $0x48] sm:$0xff]
        %v763 = vld [vmem:[%s752 + $0x50] sm:$0xff]
        %v764 = vld [vmem:[%s752 + $0x58] sm:$0xff]
        %v765 = vld [vmem:[%s752 + $0x60] sm:$0xff]
        %v766 = vld [vmem:[%s752 + $0x68] sm:$0xff]
        %v767 = vld [vmem:[%s752 + $0x70] sm:$0xff]
        %v768 = vld [vmem:[%s752 + $0x78] sm:$0xff]
        %769 = vmatprep.subr.mxu0 0.0
        %770 = vmatpush1.msra.mxu0 %v753
        %771 = vmatprep.subr.mxu0 0.0
        %772 = vmatpush1.msra.mxu0 %v754
        %773 = vmatprep.subr.mxu0 0.0
        %774 = vmatpush1.msra.mxu0 %v755
        %775 = vmatprep.subr.mxu0 0.0
        %776 = vmatpush1.msra.mxu0 %v756
        %777 = vmatprep.subr.mxu0 0.0
        %778 = vmatpush1.msra.mxu0 %v757
        %779 = vmatprep.subr.mxu0 0.0
        %780 = vmatpush1.msra.mxu0 %v758
        %781 = vmatprep.subr.mxu0 0.0
        %782 = vmatpush1.msra.mxu0 %v759
        %783 = vmatprep.subr.mxu0 0.0
        %784 = vmatpush1.msra.mxu0 %v760
        %785 = vmatprep.subr.mxu0 0.0
        %786 = vmatpush1.msra.mxu0 %v761
        %787 = vmatprep.subr.mxu0 0.0
        %788 = vmatpush1.msra.mxu0 %v762
        %789 = vmatprep.subr.mxu0 0.0
        %790 = vmatpush1.msra.mxu0 %v763
        %791 = vmatprep.subr.mxu0 0.0
        %792 = vmatpush1.msra.mxu0 %v764
        %793 = vmatprep.subr.mxu0 0.0
        %794 = vmatpush1.msra.mxu0 %v765
        %795 = vmatprep.subr.mxu0 0.0
        %796 = vmatpush1.msra.mxu0 %v766
        %797 = vmatprep.subr.mxu0 0.0
        %798 = vmatpush1.msra.mxu0 %v767
        %799 = vmatprep.subr.mxu0 0.0
        %800 = vmatpush1.msra.mxu0 %v768
        %801 = vmatprep.subr.mxu0 0.0
        %802 = vmatpush1.msra.mxu0 0.0
        %803 = vmatprep.subr.mxu0 0.0
        %804 = vmatpush1.msra.mxu0 0.0
        %805 = vmatprep.subr.mxu0 0.0
        %806 = vmatpush1.msra.mxu0 0.0
        %807 = vmatprep.subr.mxu0 0.0
        %808 = vmatpush1.msra.mxu0 0.0
        %809 = vmatprep.subr.mxu0 0.0
        %810 = vmatpush1.msra.mxu0 0.0
        %811 = vmatprep.subr.mxu0 0.0
        %812 = vmatpush1.msra.mxu0 0.0
        %813 = vmatprep.subr.mxu0 0.0
        %814 = vmatpush1.msra.mxu0 0.0
        %815 = vmatprep.subr.mxu0 0.0
        %816 = vmatpush1.msra.mxu0 0.0
        %817 = vmatprep.subr.mxu0 0.0
        %818 = vmatpush1.msra.mxu0 0.0
        %819 = vmatprep.subr.mxu0 0.0
        %820 = vmatpush1.msra.mxu0 0.0
        %821 = vmatprep.subr.mxu0 0.0
        %822 = vmatpush1.msra.mxu0 0.0
        %823 = vmatprep.subr.mxu0 0.0
        %824 = vmatpush1.msra.mxu0 0.0
        %825 = vmatprep.subr.mxu0 0.0
        %826 = vmatpush1.msra.mxu0 0.0
        %827 = vmatprep.subr.mxu0 0.0
        %828 = vmatpush1.msra.mxu0 0.0
        %829 = vmatprep.subr.mxu0 0.0
        %830 = vmatpush1.msra.mxu0 0.0
        %831 = vmatprep.subr.mxu0 0.0
        %832 = vmatpush1.msra.mxu0 0.0
        %833 = vmatprep.mubr.f32.mxu0 0.0
        %834 = vmatmul.mubr.f32.gmra.mrb[0].mxu0 %v728
        %v835 = vpop.f32.mrb[0].mxu0
        %v836 = vadd.f32 0.0, %v835
        %v837 = vpop.f32.mrb[0].mxu0
        %838 = vmatprep.mubr.f32.mxu0 0.0
        %839 = vmatmul.mubr.f32.gmra.mrb[0].mxu0 %v729
        %v840 = vpop.f32.mrb[0].mxu0
        %v841 = vadd.f32 0.0, %v840
        %v842 = vpop.f32.mrb[0].mxu0
        %843 = vmatprep.mubr.f32.mxu0 0.0
        %844 = vmatmul.mubr.f32.gmra.mrb[0].mxu0 %v730
        %v845 = vpop.f32.mrb[0].mxu0
        %v846 = vadd.f32 0.0, %v845
        %v847 = vpop.f32.mrb[0].mxu0
        %848 = vmatprep.mubr.f32.mxu0 0.0
        %849 = vmatmul.mubr.f32.gmra.mrb[0].mxu0 %v731
        %v850 = vpop.f32.mrb[0].mxu0
        %v851 = vadd.f32 0.0, %v850
        %v852 = vpop.f32.mrb[0].mxu0
        %853 = vmatprep.mubr.f32.mxu0 0.0
        %854 = vmatmul.mubr.f32.gmra.mrb[0].mxu0 %v732
        %v855 = vpop.f32.mrb[0].mxu0
        %v856 = vadd.f32 0.0, %v855
        %v857 = vpop.f32.mrb[0].mxu0
        %858 = vmatprep.mubr.f32.mxu0 0.0
        %859 = vmatmul.mubr.f32.gmra.mrb[0].mxu0 %v733
        %v860 = vpop.f32.mrb[0].mxu0
        %v861 = vadd.f32 0.0, %v860
        %v862 = vpop.f32.mrb[0].mxu0
        %863 = vmatprep.mubr.f32.mxu0 0.0
        %864 = vmatmul.mubr.f32.gmra.mrb[0].mxu0 %v734
        %v865 = vpop.f32.mrb[0].mxu0
        %v866 = vadd.f32 0.0, %v865
        %v867 = vpop.f32.mrb[0].mxu0
        %868 = vmatprep.mubr.f32.mxu0 0.0
        %869 = vmatmul.mubr.f32.gmra.mrb[0].mxu0 %v735
        %v870 = vpop.f32.mrb[0].mxu0
        %v871 = vadd.f32 0.0, %v870
        %v872 = vpop.f32.mrb[0].mxu0
        %873 = vmatprep.mubr.f32.mxu0 0.0
        %874 = vmatmul.mubr.f32.gmra.mrb[0].mxu0 %v736
        %v875 = vpop.f32.mrb[0].mxu0
        %v876 = vadd.f32 0.0, %v875
        %v877 = vpop.f32.mrb[0].mxu0
        %878 = vmatprep.mubr.f32.mxu0 0.0
        %879 = vmatmul.mubr.f32.gmra.mrb[0].mxu0 %v737
        %v880 = vpop.f32.mrb[0].mxu0
        %v881 = vadd.f32 0.0, %v880
        %v882 = vpop.f32.mrb[0].mxu0
        %883 = vmatprep.mubr.f32.mxu0 0.0
        %884 = vmatmul.mubr.f32.gmra.mrb[0].mxu0 %v738
        %v885 = vpop.f32.mrb[0].mxu0
        %v886 = vadd.f32 0.0, %v885
        %v887 = vpop.f32.mrb[0].mxu0
        %888 = vmatprep.mubr.f32.mxu0 0.0
        %889 = vmatmul.mubr.f32.gmra.mrb[0].mxu0 %v739
        %v890 = vpop.f32.mrb[0].mxu0
        %v891 = vadd.f32 0.0, %v890
        %v892 = vpop.f32.mrb[0].mxu0
        %893 = vmatprep.mubr.f32.mxu0 0.0
        %894 = vmatmul.mubr.f32.gmra.mrb[0].mxu0 %v740
        %v895 = vpop.f32.mrb[0].mxu0
        %v896 = vadd.f32 0.0, %v895
        %v897 = vpop.f32.mrb[0].mxu0
        %898 = vmatprep.mubr.f32.mxu0 0.0
        %899 = vmatmul.mubr.f32.gmra.mrb[0].mxu0 %v741
        %v900 = vpop.f32.mrb[0].mxu0
        %v901 = vadd.f32 0.0, %v900
        %v902 = vpop.f32.mrb[0].mxu0
        %903 = vmatprep.mubr.f32.mxu0 0.0
        %904 = vmatmul.mubr.f32.gmra.mrb[0].mxu0 %v742
        %v905 = vpop.f32.mrb[0].mxu0
        %v906 = vadd.f32 0.0, %v905
        %v907 = vpop.f32.mrb[0].mxu0
        %908 = vmatprep.mubr.f32.mxu0 0.0
        %909 = vmatmul.mubr.f32.gmra.mrb[0].mxu0 %v743
        %v910 = vpop.f32.mrb[0].mxu0
        %v911 = vadd.f32 0.0, %v910
        %v912 = vpop.f32.mrb[0].mxu0
        %913 = vmatprep.mubr.f32.mxu0 0.0
        %914 = vmatmul.mubr.f32.gmra.mrb[0].mxu0 %v744
        %v915 = vpop.f32.mrb[0].mxu0
        %v916 = vadd.f32 0.0, %v915
        %v917 = vpop.f32.mrb[0].mxu0
        %918 = vmatprep.mubr.f32.mxu0 0.0
        %919 = vmatmul.mubr.f32.gmra.mrb[0].mxu0 %v745
        %v920 = vpop.f32.mrb[0].mxu0
        %v921 = vadd.f32 0.0, %v920
        %v922 = vpop.f32.mrb[0].mxu0
        %923 = vmatprep.mubr.f32.mxu0 0.0
        %924 = vmatmul.mubr.f32.gmra.mrb[0].mxu0 %v746
        %v925 = vpop.f32.mrb[0].mxu0
        %v926 = vadd.f32 0.0, %v925
        %v927 = vpop.f32.mrb[0].mxu0
        %928 = vmatprep.mubr.f32.mxu0 0.0
        %929 = vmatmul.mubr.f32.gmra.mrb[0].mxu0 %v747
        %v930 = vpop.f32.mrb[0].mxu0
        %v931 = vadd.f32 0.0, %v930
        %v932 = vpop.f32.mrb[0].mxu0
        %933 = vmatprep.mubr.f32.mxu0 0.0
        %934 = vmatmul.mubr.f32.gmra.mrb[0].mxu0 %v748
        %v935 = vpop.f32.mrb[0].mxu0
        %v936 = vadd.f32 0.0, %v935
        %v937 = vpop.f32.mrb[0].mxu0
        %938 = vmatprep.mubr.f32.mxu0 0.0
        %939 = vmatmul.mubr.f32.gmra.mrb[0].mxu0 %v749
        %v940 = vpop.f32.mrb[0].mxu0
        %v941 = vadd.f32 0.0, %v940
        %v942 = vpop.f32.mrb[0].mxu0
        %943 = vmatprep.mubr.f32.mxu0 0.0
        %944 = vmatmul.mubr.f32.gmra.mrb[0].mxu0 %v750
        %v945 = vpop.f32.mrb[0].mxu0
        %v946 = vadd.f32 0.0, %v945
        %v947 = vpop.f32.mrb[0].mxu0
        %948 = vmatprep.mubr.f32.mxu0 0.0
        %949 = vmatmul.mubr.f32.gmra.mrb[0].mxu0 %v751
        %v950 = vpop.f32.mrb[0].mxu0
        %v951 = vadd.f32 0.0, %v950
        %v952 = vpop.f32.mrb[0].mxu0
        %953 = vdwg.mxu0
        %v954 = vadd.f32 %v704, %v836
        %v955 = vadd.f32 %v705, %v841
        %v956 = vadd.f32 %v706, %v846
        %v957 = vadd.f32 %v707, %v851
        %v958 = vadd.f32 %v708, %v856
        %v959 = vadd.f32 %v709, %v861
        %v960 = vadd.f32 %v710, %v866
        %v961 = vadd.f32 %v711, %v871
        %v962 = vadd.f32 %v712, %v876
        %v963 = vadd.f32 %v713, %v881
        %v964 = vadd.f32 %v714, %v886
        %v965 = vadd.f32 %v715, %v891
        %v966 = vadd.f32 %v716, %v896
        %v967 = vadd.f32 %v717, %v901
        %v968 = vadd.f32 %v718, %v906
        %v969 = vadd.f32 %v719, %v911
        %v970 = vadd.f32 %v720, %v916
        %v971 = vadd.f32 %v721, %v921
        %v972 = vadd.f32 %v722, %v926
        %v973 = vadd.f32 %v723, %v931
        %v974 = vadd.f32 %v724, %v936
        %v975 = vadd.f32 %v725, %v941
        %v976 = vadd.f32 %v726, %v946
        %v977 = vadd.f32 %v727, %v951
        %s978 = sadd.s32 %s219, 1
        %s979 = smul.u32 %s978, 24
        %s980 = scalar_lea.vmem %s191, %s979 [#allocation2]
        %v981 = vld [vmem:[%s980] sm:$0xff]
        %v982 = vld [vmem:[%s980 + $0x8] sm:$0xff]
        %v983 = vld [vmem:[%s980 + $0x18] sm:$0xff]
        %v984 = vld [vmem:[%s980 + $0x20] sm:$0xff]
        %v985 = vld [vmem:[%s980 + $0x30] sm:$0xff]
        %v986 = vld [vmem:[%s980 + $0x38] sm:$0xff]
        %v987 = vld [vmem:[%s980 + $0x48] sm:$0xff]
        %v988 = vld [vmem:[%s980 + $0x50] sm:$0xff]
        %v989 = vld [vmem:[%s980 + $0x60] sm:$0xff]
        %v990 = vld [vmem:[%s980 + $0x68] sm:$0xff]
        %v991 = vld [vmem:[%s980 + $0x78] sm:$0xff]
        %v992 = vld [vmem:[%s980 + $0x80] sm:$0xff]
        %v993 = vld [vmem:[%s980 + $0x90] sm:$0xff]
        %v994 = vld [vmem:[%s980 + $0x98] sm:$0xff]
        %v995 = vld [vmem:[%s980 + $0xa8] sm:$0xff]
        %v996 = vld [vmem:[%s980 + $0xb0] sm:$0xff]
        %v997 = vld [vmem:[%s980 + $0xc0] sm:$0xff]
        %v998 = vld [vmem:[%s980 + $0xc8] sm:$0xff]
        %v999 = vld [vmem:[%s980 + $0xd8] sm:$0xff]
        %v1000 = vld [vmem:[%s980 + $0xe0] sm:$0xff]
        %v1001 = vld [vmem:[%s980 + $0xf0] sm:$0xff]
        %v1002 = vld [vmem:[%s980 + $0xf8] sm:$0xff]
        %v1003 = vld [vmem:[%s980 + $0x108] sm:$0xff]
        %v1004 = vld [vmem:[%s980 + $0x110] sm:$0xff]
        %s1005 = scalar_lea.vmem [#allocation5], 384
        %v1006 = vld [vmem:[%s1005] sm:$0xff]
        %v1007 = vld [vmem:[%s1005 + $0x8] sm:$0xff]
        %v1008 = vld [vmem:[%s1005 + $0x10] sm:$0xff]
        %v1009 = vld [vmem:[%s1005 + $0x18] sm:$0xff]
        %v1010 = vld [vmem:[%s1005 + $0x20] sm:$0xff]
        %v1011 = vld [vmem:[%s1005 + $0x28] sm:$0xff]
        %v1012 = vld [vmem:[%s1005 + $0x30] sm:$0xff]
        %v1013 = vld [vmem:[%s1005 + $0x38] sm:$0xff]
        %v1014 = vld [vmem:[%s1005 + $0x40] sm:$0xff]
        %v1015 = vld [vmem:[%s1005 + $0x48] sm:$0xff]
        %v1016 = vld [vmem:[%s1005 + $0x50] sm:$0xff]
        %v1017 = vld [vmem:[%s1005 + $0x58] sm:$0xff]
        %v1018 = vld [vmem:[%s1005 + $0x60] sm:$0xff]
        %v1019 = vld [vmem:[%s1005 + $0x68] sm:$0xff]
        %v1020 = vld [vmem:[%s1005 + $0x70] sm:$0xff]
        %v1021 = vld [vmem:[%s1005 + $0x78] sm:$0xff]
        %1022 = vmatprep.subr.mxu0 0.0
        %1023 = vmatpush1.msra.mxu0 %v1006
        %1024 = vmatprep.subr.mxu0 0.0
        %1025 = vmatpush1.msra.mxu0 %v1007
        %1026 = vmatprep.subr.mxu0 0.0
        %1027 = vmatpush1.msra.mxu0 %v1008
        %1028 = vmatprep.subr.mxu0 0.0
        %1029 = vmatpush1.msra.mxu0 %v1009
        %1030 = vmatprep.subr.mxu0 0.0
        %1031 = vmatpush1.msra.mxu0 %v1010
        %1032 = vmatprep.subr.mxu0 0.0
        %1033 = vmatpush1.msra.mxu0 %v1011
        %1034 = vmatprep.subr.mxu0 0.0
        %1035 = vmatpush1.msra.mxu0 %v1012
        %1036 = vmatprep.subr.mxu0 0.0
        %1037 = vmatpush1.msra.mxu0 %v1013
        %1038 = vmatprep.subr.mxu0 0.0
        %1039 = vmatpush1.msra.mxu0 %v1014
        %1040 = vmatprep.subr.mxu0 0.0
        %1041 = vmatpush1.msra.mxu0 %v1015
        %1042 = vmatprep.subr.mxu0 0.0
        %1043 = vmatpush1.msra.mxu0 %v1016
        %1044 = vmatprep.subr.mxu0 0.0
        %1045 = vmatpush1.msra.mxu0 %v1017
        %1046 = vmatprep.subr.mxu0 0.0
        %1047 = vmatpush1.msra.mxu0 %v1018
        %1048 = vmatprep.subr.mxu0 0.0
        %1049 = vmatpush1.msra.mxu0 %v1019
        %1050 = vmatprep.subr.mxu0 0.0
        %1051 = vmatpush1.msra.mxu0 %v1020
        %1052 = vmatprep.subr.mxu0 0.0
        %1053 = vmatpush1.msra.mxu0 %v1021
        %1054 = vmatprep.subr.mxu0 0.0
        %1055 = vmatpush1.msra.mxu0 0.0
        %1056 = vmatprep.subr.mxu0 0.0
        %1057 = vmatpush1.msra.mxu0 0.0
        %1058 = vmatprep.subr.mxu0 0.0
        %1059 = vmatpush1.msra.mxu0 0.0
        %1060 = vmatprep.subr.mxu0 0.0
        %1061 = vmatpush1.msra.mxu0 0.0
        %1062 = vmatprep.subr.mxu0 0.0
        %1063 = vmatpush1.msra.mxu0 0.0
        %1064 = vmatprep.subr.mxu0 0.0
        %1065 = vmatpush1.msra.mxu0 0.0
        %1066 = vmatprep.subr.mxu0 0.0
        %1067 = vmatpush1.msra.mxu0 0.0
        %1068 = vmatprep.subr.mxu0 0.0
        %1069 = vmatpush1.msra.mxu0 0.0
        %1070 = vmatprep.subr.mxu0 0.0
        %1071 = vmatpush1.msra.mxu0 0.0
        %1072 = vmatprep.subr.mxu0 0.0
        %1073 = vmatpush1.msra.mxu0 0.0
        %1074 = vmatprep.subr.mxu0 0.0
        %1075 = vmatpush1.msra.mxu0 0.0
        %1076 = vmatprep.subr.mxu0 0.0
        %1077 = vmatpush1.msra.mxu0 0.0
        %1078 = vmatprep.subr.mxu0 0.0
        %1079 = vmatpush1.msra.mxu0 0.0
        %1080 = vmatprep.subr.mxu0 0.0
        %1081 = vmatpush1.msra.mxu0 0.0
        %1082 = vmatprep.subr.mxu0 0.0
        %1083 = vmatpush1.msra.mxu0 0.0
        %1084 = vmatprep.subr.mxu0 0.0
        %1085 = vmatpush1.msra.mxu0 0.0
        %1086 = vmatprep.mubr.f32.mxu0 0.0
        %1087 = vmatmul.mubr.f32.gmra.mrb[0].mxu0 %v981
        %v1088 = vpop.f32.mrb[0].mxu0
        %v1089 = vadd.f32 0.0, %v1088
        %v1090 = vpop.f32.mrb[0].mxu0
        %1091 = vmatprep.mubr.f32.mxu0 0.0
        %1092 = vmatmul.mubr.f32.gmra.mrb[0].mxu0 %v982
        %v1093 = vpop.f32.mrb[0].mxu0
        %v1094 = vadd.f32 0.0, %v1093
        %v1095 = vpop.f32.mrb[0].mxu0
        %1096 = vmatprep.mubr.f32.mxu0 0.0
        %1097 = vmatmul.mubr.f32.gmra.mrb[0].mxu0 %v983
        %v1098 = vpop.f32.mrb[0].mxu0
        %v1099 = vadd.f32 0.0, %v1098
        %v1100 = vpop.f32.mrb[0].mxu0
        %1101 = vmatprep.mubr.f32.mxu0 0.0
        %1102 = vmatmul.mubr.f32.gmra.mrb[0].mxu0 %v984
        %v1103 = vpop.f32.mrb[0].mxu0
        %v1104 = vadd.f32 0.0, %v1103
        %v1105 = vpop.f32.mrb[0].mxu0
        %1106 = vmatprep.mubr.f32.mxu0 0.0
        %1107 = vmatmul.mubr.f32.gmra.mrb[0].mxu0 %v985
        %v1108 = vpop.f32.mrb[0].mxu0
        %v1109 = vadd.f32 0.0, %v1108
        %v1110 = vpop.f32.mrb[0].mxu0
        %1111 = vmatprep.mubr.f32.mxu0 0.0
        %1112 = vmatmul.mubr.f32.gmra.mrb[0].mxu0 %v986
        %v1113 = vpop.f32.mrb[0].mxu0
        %v1114 = vadd.f32 0.0, %v1113
        %v1115 = vpop.f32.mrb[0].mxu0
        %1116 = vmatprep.mubr.f32.mxu0 0.0
        %1117 = vmatmul.mubr.f32.gmra.mrb[0].mxu0 %v987
        %v1118 = vpop.f32.mrb[0].mxu0
        %v1119 = vadd.f32 0.0, %v1118
        %v1120 = vpop.f32.mrb[0].mxu0
        %1121 = vmatprep.mubr.f32.mxu0 0.0
        %1122 = vmatmul.mubr.f32.gmra.mrb[0].mxu0 %v988
        %v1123 = vpop.f32.mrb[0].mxu0
        %v1124 = vadd.f32 0.0, %v1123
        %v1125 = vpop.f32.mrb[0].mxu0
        %1126 = vmatprep.mubr.f32.mxu0 0.0
        %1127 = vmatmul.mubr.f32.gmra.mrb[0].mxu0 %v989
        %v1128 = vpop.f32.mrb[0].mxu0
        %v1129 = vadd.f32 0.0, %v1128
        %v1130 = vpop.f32.mrb[0].mxu0
        %1131 = vmatprep.mubr.f32.mxu0 0.0
        %1132 = vmatmul.mubr.f32.gmra.mrb[0].mxu0 %v990
        %v1133 = vpop.f32.mrb[0].mxu0
        %v1134 = vadd.f32 0.0, %v1133
        %v1135 = vpop.f32.mrb[0].mxu0
        %1136 = vmatprep.mubr.f32.mxu0 0.0
        %1137 = vmatmul.mubr.f32.gmra.mrb[0].mxu0 %v991
        %v1138 = vpop.f32.mrb[0].mxu0
        %v1139 = vadd.f32 0.0, %v1138
        %v1140 = vpop.f32.mrb[0].mxu0
        %1141 = vmatprep.mubr.f32.mxu0 0.0
        %1142 = vmatmul.mubr.f32.gmra.mrb[0].mxu0 %v992
        %v1143 = vpop.f32.mrb[0].mxu0
        %v1144 = vadd.f32 0.0, %v1143
        %v1145 = vpop.f32.mrb[0].mxu0
        %1146 = vmatprep.mubr.f32.mxu0 0.0
        %1147 = vmatmul.mubr.f32.gmra.mrb[0].mxu0 %v993
        %v1148 = vpop.f32.mrb[0].mxu0
        %v1149 = vadd.f32 0.0, %v1148
        %v1150 = vpop.f32.mrb[0].mxu0
        %1151 = vmatprep.mubr.f32.mxu0 0.0
        %1152 = vmatmul.mubr.f32.gmra.mrb[0].mxu0 %v994
        %v1153 = vpop.f32.mrb[0].mxu0
        %v1154 = vadd.f32 0.0, %v1153
        %v1155 = vpop.f32.mrb[0].mxu0
        %1156 = vmatprep.mubr.f32.mxu0 0.0
        %1157 = vmatmul.mubr.f32.gmra.mrb[0].mxu0 %v995
        %v1158 = vpop.f32.mrb[0].mxu0
        %v1159 = vadd.f32 0.0, %v1158
        %v1160 = vpop.f32.mrb[0].mxu0
        %1161 = vmatprep.mubr.f32.mxu0 0.0
        %1162 = vmatmul.mubr.f32.gmra.mrb[0].mxu0 %v996
        %v1163 = vpop.f32.mrb[0].mxu0
        %v1164 = vadd.f32 0.0, %v1163
        %v1165 = vpop.f32.mrb[0].mxu0
        %1166 = vmatprep.mubr.f32.mxu0 0.0
        %1167 = vmatmul.mubr.f32.gmra.mrb[0].mxu0 %v997
        %v1168 = vpop.f32.mrb[0].mxu0
        %v1169 = vadd.f32 0.0, %v1168
        %v1170 = vpop.f32.mrb[0].mxu0
        %1171 = vmatprep.mubr.f32.mxu0 0.0
        %1172 = vmatmul.mubr.f32.gmra.mrb[0].mxu0 %v998
        %v1173 = vpop.f32.mrb[0].mxu0
        %v1174 = vadd.f32 0.0, %v1173
        %v1175 = vpop.f32.mrb[0].mxu0
        %1176 = vmatprep.mubr.f32.mxu0 0.0
        %1177 = vmatmul.mubr.f32.gmra.mrb[0].mxu0 %v999
        %v1178 = vpop.f32.mrb[0].mxu0
        %v1179 = vadd.f32 0.0, %v1178
        %v1180 = vpop.f32.mrb[0].mxu0
        %1181 = vmatprep.mubr.f32.mxu0 0.0
        %1182 = vmatmul.mubr.f32.gmra.mrb[0].mxu0 %v1000
        %v1183 = vpop.f32.mrb[0].mxu0
        %v1184 = vadd.f32 0.0, %v1183
        %v1185 = vpop.f32.mrb[0].mxu0
        %1186 = vmatprep.mubr.f32.mxu0 0.0
        %1187 = vmatmul.mubr.f32.gmra.mrb[0].mxu0 %v1001
        %v1188 = vpop.f32.mrb[0].mxu0
        %v1189 = vadd.f32 0.0, %v1188
        %v1190 = vpop.f32.mrb[0].mxu0
        %1191 = vmatprep.mubr.f32.mxu0 0.0
        %1192 = vmatmul.mubr.f32.gmra.mrb[0].mxu0 %v1002
        %v1193 = vpop.f32.mrb[0].mxu0
        %v1194 = vadd.f32 0.0, %v1193
        %v1195 = vpop.f32.mrb[0].mxu0
        %1196 = vmatprep.mubr.f32.mxu0 0.0
        %1197 = vmatmul.mubr.f32.gmra.mrb[0].mxu0 %v1003
        %v1198 = vpop.f32.mrb[0].mxu0
        %v1199 = vadd.f32 0.0, %v1198
        %v1200 = vpop.f32.mrb[0].mxu0
        %1201 = vmatprep.mubr.f32.mxu0 0.0
        %1202 = vmatmul.mubr.f32.gmra.mrb[0].mxu0 %v1004
        %v1203 = vpop.f32.mrb[0].mxu0
        %v1204 = vadd.f32 0.0, %v1203
        %v1205 = vpop.f32.mrb[0].mxu0
        %1206 = vdwg.mxu0
        %v1207 = vadd.f32 %v954, %v1089
        %v1208 = vadd.f32 %v955, %v1094
        %v1209 = vadd.f32 %v956, %v1099
        %v1210 = vadd.f32 %v957, %v1104
        %v1211 = vadd.f32 %v958, %v1109
        %v1212 = vadd.f32 %v959, %v1114
        %v1213 = vadd.f32 %v960, %v1119
        %v1214 = vadd.f32 %v961, %v1124
        %v1215 = vadd.f32 %v962, %v1129
        %v1216 = vadd.f32 %v963, %v1134
        %v1217 = vadd.f32 %v964, %v1139
        %v1218 = vadd.f32 %v965, %v1144
        %v1219 = vadd.f32 %v966, %v1149
        %v1220 = vadd.f32 %v967, %v1154
        %v1221 = vadd.f32 %v968, %v1159
        %v1222 = vadd.f32 %v969, %v1164
        %v1223 = vadd.f32 %v970, %v1169
        %v1224 = vadd.f32 %v971, %v1174
        %v1225 = vadd.f32 %v972, %v1179
        %v1226 = vadd.f32 %v973, %v1184
        %v1227 = vadd.f32 %v974, %v1189
        %v1228 = vadd.f32 %v975, %v1194
        %v1229 = vadd.f32 %v976, %v1199
        %v1230 = vadd.f32 %v977, %v1204
        %v1231 = vld [vmem:[%s980 + $0x1] sm:$0xff]
        %v1232 = vld [vmem:[%s980 + $0x9] sm:$0xff]
        %v1233 = vld [vmem:[%s980 + $0x19] sm:$0xff]
        %v1234 = vld [vmem:[%s980 + $0x21] sm:$0xff]
        %v1235 = vld [vmem:[%s980 + $0x31] sm:$0xff]
        %v1236 = vld [vmem:[%s980 + $0x39] sm:$0xff]
        %v1237 = vld [vmem:[%s980 + $0x49] sm:$0xff]
        %v1238 = vld [vmem:[%s980 + $0x51] sm:$0xff]
        %v1239 = vld [vmem:[%s980 + $0x61] sm:$0xff]
        %v1240 = vld [vmem:[%s980 + $0x69] sm:$0xff]
        %v1241 = vld [vmem:[%s980 + $0x79] sm:$0xff]
        %v1242 = vld [vmem:[%s980 + $0x81] sm:$0xff]
        %v1243 = vld [vmem:[%s980 + $0x91] sm:$0xff]
        %v1244 = vld [vmem:[%s980 + $0x99] sm:$0xff]
        %v1245 = vld [vmem:[%s980 + $0xa9] sm:$0xff]
        %v1246 = vld [vmem:[%s980 + $0xb1] sm:$0xff]
        %v1247 = vld [vmem:[%s980 + $0xc1] sm:$0xff]
        %v1248 = vld [vmem:[%s980 + $0xc9] sm:$0xff]
        %v1249 = vld [vmem:[%s980 + $0xd9] sm:$0xff]
        %v1250 = vld [vmem:[%s980 + $0xe1] sm:$0xff]
        %v1251 = vld [vmem:[%s980 + $0xf1] sm:$0xff]
        %v1252 = vld [vmem:[%s980 + $0xf9] sm:$0xff]
        %v1253 = vld [vmem:[%s980 + $0x109] sm:$0xff]
        %v1254 = vld [vmem:[%s980 + $0x111] sm:$0xff]
        %s1255 = scalar_lea.vmem [#allocation5], 512
        %v1256 = vld [vmem:[%s1255] sm:$0xff]
        %v1257 = vld [vmem:[%s1255 + $0x8] sm:$0xff]
        %v1258 = vld [vmem:[%s1255 + $0x10] sm:$0xff]
        %v1259 = vld [vmem:[%s1255 + $0x18] sm:$0xff]
        %v1260 = vld [vmem:[%s1255 + $0x20] sm:$0xff]
        %v1261 = vld [vmem:[%s1255 + $0x28] sm:$0xff]
        %v1262 = vld [vmem:[%s1255 + $0x30] sm:$0xff]
        %v1263 = vld [vmem:[%s1255 + $0x38] sm:$0xff]
        %v1264 = vld [vmem:[%s1255 + $0x40] sm:$0xff]
        %v1265 = vld [vmem:[%s1255 + $0x48] sm:$0xff]
        %v1266 = vld [vmem:[%s1255 + $0x50] sm:$0xff]
        %v1267 = vld [vmem:[%s1255 + $0x58] sm:$0xff]
        %v1268 = vld [vmem:[%s1255 + $0x60] sm:$0xff]
        %v1269 = vld [vmem:[%s1255 + $0x68] sm:$0xff]
        %v1270 = vld [vmem:[%s1255 + $0x70] sm:$0xff]
        %v1271 = vld [vmem:[%s1255 + $0x78] sm:$0xff]
        %1272 = vmatprep.subr.mxu0 0.0
        %1273 = vmatpush1.msra.mxu0 %v1256
        %1274 = vmatprep.subr.mxu0 0.0
        %1275 = vmatpush1.msra.mxu0 %v1257
        %1276 = vmatprep.subr.mxu0 0.0
        %1277 = vmatpush1.msra.mxu0 %v1258
        %1278 = vmatprep.subr.mxu0 0.0
        %1279 = vmatpush1.msra.mxu0 %v1259
        %1280 = vmatprep.subr.mxu0 0.0
        %1281 = vmatpush1.msra.mxu0 %v1260
        %1282 = vmatprep.subr.mxu0 0.0
        %1283 = vmatpush1.msra.mxu0 %v1261
        %1284 = vmatprep.subr.mxu0 0.0
        %1285 = vmatpush1.msra.mxu0 %v1262
        %1286 = vmatprep.subr.mxu0 0.0
        %1287 = vmatpush1.msra.mxu0 %v1263
        %1288 = vmatprep.subr.mxu0 0.0
        %1289 = vmatpush1.msra.mxu0 %v1264
        %1290 = vmatprep.subr.mxu0 0.0
        %1291 = vmatpush1.msra.mxu0 %v1265
        %1292 = vmatprep.subr.mxu0 0.0
        %1293 = vmatpush1.msra.mxu0 %v1266
        %1294 = vmatprep.subr.mxu0 0.0
        %1295 = vmatpush1.msra.mxu0 %v1267
        %1296 = vmatprep.subr.mxu0 0.0
        %1297 = vmatpush1.msra.mxu0 %v1268
        %1298 = vmatprep.subr.mxu0 0.0
        %1299 = vmatpush1.msra.mxu0 %v1269
        %1300 = vmatprep.subr.mxu0 0.0
        %1301 = vmatpush1.msra.mxu0 %v1270
        %1302 = vmatprep.subr.mxu0 0.0
        %1303 = vmatpush1.msra.mxu0 %v1271
        %1304 = vmatprep.subr.mxu0 0.0
        %1305 = vmatpush1.msra.mxu0 0.0
        %1306 = vmatprep.subr.mxu0 0.0
        %1307 = vmatpush1.msra.mxu0 0.0
        %1308 = vmatprep.subr.mxu0 0.0
        %1309 = vmatpush1.msra.mxu0 0.0
        %1310 = vmatprep.subr.mxu0 0.0
        %1311 = vmatpush1.msra.mxu0 0.0
        %1312 = vmatprep.subr.mxu0 0.0
        %1313 = vmatpush1.msra.mxu0 0.0
        %1314 = vmatprep.subr.mxu0 0.0
        %1315 = vmatpush1.msra.mxu0 0.0
        %1316 = vmatprep.subr.mxu0 0.0
        %1317 = vmatpush1.msra.mxu0 0.0
        %1318 = vmatprep.subr.mxu0 0.0
        %1319 = vmatpush1.msra.mxu0 0.0
        %1320 = vmatprep.subr.mxu0 0.0
        %1321 = vmatpush1.msra.mxu0 0.0
        %1322 = vmatprep.subr.mxu0 0.0
        %1323 = vmatpush1.msra.mxu0 0.0
        %1324 = vmatprep.subr.mxu0 0.0
        %1325 = vmatpush1.msra.mxu0 0.0
        %1326 = vmatprep.subr.mxu0 0.0
        %1327 = vmatpush1.msra.mxu0 0.0
        %1328 = vmatprep.subr.mxu0 0.0
        %1329 = vmatpush1.msra.mxu0 0.0
        %1330 = vmatprep.subr.mxu0 0.0
        %1331 = vmatpush1.msra.mxu0 0.0
        %1332 = vmatprep.subr.mxu0 0.0
        %1333 = vmatpush1.msra.mxu0 0.0
        %1334 = vmatprep.subr.mxu0 0.0
        %1335 = vmatpush1.msra.mxu0 0.0
        %1336 = vmatprep.mubr.f32.mxu0 0.0
        %1337 = vmatmul.mubr.f32.gmra.mrb[0].mxu0 %v1231
        %v1338 = vpop.f32.mrb[0].mxu0
        %v1339 = vadd.f32 0.0, %v1338
        %v1340 = vpop.f32.mrb[0].mxu0
        %1341 = vmatprep.mubr.f32.mxu0 0.0
        %1342 = vmatmul.mubr.f32.gmra.mrb[0].mxu0 %v1232
        %v1343 = vpop.f32.mrb[0].mxu0
        %v1344 = vadd.f32 0.0, %v1343
        %v1345 = vpop.f32.mrb[0].mxu0
        %1346 = vmatprep.mubr.f32.mxu0 0.0
        %1347 = vmatmul.mubr.f32.gmra.mrb[0].mxu0 %v1233
        %v1348 = vpop.f32.mrb[0].mxu0
        %v1349 = vadd.f32 0.0, %v1348
        %v1350 = vpop.f32.mrb[0].mxu0
        %1351 = vmatprep.mubr.f32.mxu0 0.0
        %1352 = vmatmul.mubr.f32.gmra.mrb[0].mxu0 %v1234
        %v1353 = vpop.f32.mrb[0].mxu0
        %v1354 = vadd.f32 0.0, %v1353
        %v1355 = vpop.f32.mrb[0].mxu0
        %1356 = vmatprep.mubr.f32.mxu0 0.0
        %1357 = vmatmul.mubr.f32.gmra.mrb[0].mxu0 %v1235
        %v1358 = vpop.f32.mrb[0].mxu0
        %v1359 = vadd.f32 0.0, %v1358
        %v1360 = vpop.f32.mrb[0].mxu0
        %1361 = vmatprep.mubr.f32.mxu0 0.0
        %1362 = vmatmul.mubr.f32.gmra.mrb[0].mxu0 %v1236
        %v1363 = vpop.f32.mrb[0].mxu0
        %v1364 = vadd.f32 0.0, %v1363
        %v1365 = vpop.f32.mrb[0].mxu0
        %1366 = vmatprep.mubr.f32.mxu0 0.0
        %1367 = vmatmul.mubr.f32.gmra.mrb[0].mxu0 %v1237
        %v1368 = vpop.f32.mrb[0].mxu0
        %v1369 = vadd.f32 0.0, %v1368
        %v1370 = vpop.f32.mrb[0].mxu0
        %1371 = vmatprep.mubr.f32.mxu0 0.0
        %1372 = vmatmul.mubr.f32.gmra.mrb[0].mxu0 %v1238
        %v1373 = vpop.f32.mrb[0].mxu0
        %v1374 = vadd.f32 0.0, %v1373
        %v1375 = vpop.f32.mrb[0].mxu0
        %1376 = vmatprep.mubr.f32.mxu0 0.0
        %1377 = vmatmul.mubr.f32.gmra.mrb[0].mxu0 %v1239
        %v1378 = vpop.f32.mrb[0].mxu0
        %v1379 = vadd.f32 0.0, %v1378
        %v1380 = vpop.f32.mrb[0].mxu0
        %1381 = vmatprep.mubr.f32.mxu0 0.0
        %1382 = vmatmul.mubr.f32.gmra.mrb[0].mxu0 %v1240
        %v1383 = vpop.f32.mrb[0].mxu0
        %v1384 = vadd.f32 0.0, %v1383
        %v1385 = vpop.f32.mrb[0].mxu0
        %1386 = vmatprep.mubr.f32.mxu0 0.0
        %1387 = vmatmul.mubr.f32.gmra.mrb[0].mxu0 %v1241
        %v1388 = vpop.f32.mrb[0].mxu0
        %v1389 = vadd.f32 0.0, %v1388
        %v1390 = vpop.f32.mrb[0].mxu0
        %1391 = vmatprep.mubr.f32.mxu0 0.0
        %1392 = vmatmul.mubr.f32.gmra.mrb[0].mxu0 %v1242
        %v1393 = vpop.f32.mrb[0].mxu0
        %v1394 = vadd.f32 0.0, %v1393
        %v1395 = vpop.f32.mrb[0].mxu0
        %1396 = vmatprep.mubr.f32.mxu0 0.0
        %1397 = vmatmul.mubr.f32.gmra.mrb[0].mxu0 %v1243
        %v1398 = vpop.f32.mrb[0].mxu0
        %v1399 = vadd.f32 0.0, %v1398
        %v1400 = vpop.f32.mrb[0].mxu0
        %1401 = vmatprep.mubr.f32.mxu0 0.0
        %1402 = vmatmul.mubr.f32.gmra.mrb[0].mxu0 %v1244
        %v1403 = vpop.f32.mrb[0].mxu0
        %v1404 = vadd.f32 0.0, %v1403
        %v1405 = vpop.f32.mrb[0].mxu0
        %1406 = vmatprep.mubr.f32.mxu0 0.0
        %1407 = vmatmul.mubr.f32.gmra.mrb[0].mxu0 %v1245
        %v1408 = vpop.f32.mrb[0].mxu0
        %v1409 = vadd.f32 0.0, %v1408
        %v1410 = vpop.f32.mrb[0].mxu0
        %1411 = vmatprep.mubr.f32.mxu0 0.0
        %1412 = vmatmul.mubr.f32.gmra.mrb[0].mxu0 %v1246
        %v1413 = vpop.f32.mrb[0].mxu0
        %v1414 = vadd.f32 0.0, %v1413
        %v1415 = vpop.f32.mrb[0].mxu0
        %1416 = vmatprep.mubr.f32.mxu0 0.0
        %1417 = vmatmul.mubr.f32.gmra.mrb[0].mxu0 %v1247
        %v1418 = vpop.f32.mrb[0].mxu0
        %v1419 = vadd.f32 0.0, %v1418
        %v1420 = vpop.f32.mrb[0].mxu0
        %1421 = vmatprep.mubr.f32.mxu0 0.0
        %1422 = vmatmul.mubr.f32.gmra.mrb[0].mxu0 %v1248
        %v1423 = vpop.f32.mrb[0].mxu0
        %v1424 = vadd.f32 0.0, %v1423
        %v1425 = vpop.f32.mrb[0].mxu0
        %1426 = vmatprep.mubr.f32.mxu0 0.0
        %1427 = vmatmul.mubr.f32.gmra.mrb[0].mxu0 %v1249
        %v1428 = vpop.f32.mrb[0].mxu0
        %v1429 = vadd.f32 0.0, %v1428
        %v1430 = vpop.f32.mrb[0].mxu0
        %1431 = vmatprep.mubr.f32.mxu0 0.0
        %1432 = vmatmul.mubr.f32.gmra.mrb[0].mxu0 %v1250
        %v1433 = vpop.f32.mrb[0].mxu0
        %v1434 = vadd.f32 0.0, %v1433
        %v1435 = vpop.f32.mrb[0].mxu0
        %1436 = vmatprep.mubr.f32.mxu0 0.0
        %1437 = vmatmul.mubr.f32.gmra.mrb[0].mxu0 %v1251
        %v1438 = vpop.f32.mrb[0].mxu0
        %v1439 = vadd.f32 0.0, %v1438
        %v1440 = vpop.f32.mrb[0].mxu0
        %1441 = vmatprep.mubr.f32.mxu0 0.0
        %1442 = vmatmul.mubr.f32.gmra.mrb[0].mxu0 %v1252
        %v1443 = vpop.f32.mrb[0].mxu0
        %v1444 = vadd.f32 0.0, %v1443
        %v1445 = vpop.f32.mrb[0].mxu0
        %1446 = vmatprep.mubr.f32.mxu0 0.0
        %1447 = vmatmul.mubr.f32.gmra.mrb[0].mxu0 %v1253
        %v1448 = vpop.f32.mrb[0].mxu0
        %v1449 = vadd.f32 0.0, %v1448
        %v1450 = vpop.f32.mrb[0].mxu0
        %1451 = vmatprep.mubr.f32.mxu0 0.0
        %1452 = vmatmul.mubr.f32.gmra.mrb[0].mxu0 %v1254
        %v1453 = vpop.f32.mrb[0].mxu0
        %v1454 = vadd.f32 0.0, %v1453
        %v1455 = vpop.f32.mrb[0].mxu0
        %1456 = vdwg.mxu0
        %v1457 = vadd.f32 %v1207, %v1339
        %v1458 = vadd.f32 %v1208, %v1344
        %v1459 = vadd.f32 %v1209, %v1349
        %v1460 = vadd.f32 %v1210, %v1354
        %v1461 = vadd.f32 %v1211, %v1359
        %v1462 = vadd.f32 %v1212, %v1364
        %v1463 = vadd.f32 %v1213, %v1369
        %v1464 = vadd.f32 %v1214, %v1374
        %v1465 = vadd.f32 %v1215, %v1379
        %v1466 = vadd.f32 %v1216, %v1384
        %v1467 = vadd.f32 %v1217, %v1389
        %v1468 = vadd.f32 %v1218, %v1394
        %v1469 = vadd.f32 %v1219, %v1399
        %v1470 = vadd.f32 %v1220, %v1404
        %v1471 = vadd.f32 %v1221, %v1409
        %v1472 = vadd.f32 %v1222, %v1414
        %v1473 = vadd.f32 %v1223, %v1419
        %v1474 = vadd.f32 %v1224, %v1424
        %v1475 = vadd.f32 %v1225, %v1429
        %v1476 = vadd.f32 %v1226, %v1434
        %v1477 = vadd.f32 %v1227, %v1439
        %v1478 = vadd.f32 %v1228, %v1444
        %v1479 = vadd.f32 %v1229, %v1449
        %v1480 = vadd.f32 %v1230, %v1454
        %v1481 = vld [vmem:[%s980 + $0x2] sm:$0xff]
        %v1482 = vld [vmem:[%s980 + $0xa] sm:$0xff]
        %v1483 = vld [vmem:[%s980 + $0x1a] sm:$0xff]
        %v1484 = vld [vmem:[%s980 + $0x22] sm:$0xff]
        %v1485 = vld [vmem:[%s980 + $0x32] sm:$0xff]
        %v1486 = vld [vmem:[%s980 + $0x3a] sm:$0xff]
        %v1487 = vld [vmem:[%s980 + $0x4a] sm:$0xff]
        %v1488 = vld [vmem:[%s980 + $0x52] sm:$0xff]
        %v1489 = vld [vmem:[%s980 + $0x62] sm:$0xff]
        %v1490 = vld [vmem:[%s980 + $0x6a] sm:$0xff]
        %v1491 = vld [vmem:[%s980 + $0x7a] sm:$0xff]
        %v1492 = vld [vmem:[%s980 + $0x82] sm:$0xff]
        %v1493 = vld [vmem:[%s980 + $0x92] sm:$0xff]
        %v1494 = vld [vmem:[%s980 + $0x9a] sm:$0xff]
        %v1495 = vld [vmem:[%s980 + $0xaa] sm:$0xff]
        %v1496 = vld [vmem:[%s980 + $0xb2] sm:$0xff]
        %v1497 = vld [vmem:[%s980 + $0xc2] sm:$0xff]
        %v1498 = vld [vmem:[%s980 + $0xca] sm:$0xff]
        %v1499 = vld [vmem:[%s980 + $0xda] sm:$0xff]
        %v1500 = vld [vmem:[%s980 + $0xe2] sm:$0xff]
        %v1501 = vld [vmem:[%s980 + $0xf2] sm:$0xff]
        %v1502 = vld [vmem:[%s980 + $0xfa] sm:$0xff]
        %v1503 = vld [vmem:[%s980 + $0x10a] sm:$0xff]
        %v1504 = vld [vmem:[%s980 + $0x112] sm:$0xff]
        %s1505 = scalar_lea.vmem [#allocation5], 640
        %v1506 = vld [vmem:[%s1505] sm:$0xff]
        %v1507 = vld [vmem:[%s1505 + $0x8] sm:$0xff]
        %v1508 = vld [vmem:[%s1505 + $0x10] sm:$0xff]
        %v1509 = vld [vmem:[%s1505 + $0x18] sm:$0xff]
        %v1510 = vld [vmem:[%s1505 + $0x20] sm:$0xff]
        %v1511 = vld [vmem:[%s1505 + $0x28] sm:$0xff]
        %v1512 = vld [vmem:[%s1505 + $0x30] sm:$0xff]
        %v1513 = vld [vmem:[%s1505 + $0x38] sm:$0xff]
        %v1514 = vld [vmem:[%s1505 + $0x40] sm:$0xff]
        %v1515 = vld [vmem:[%s1505 + $0x48] sm:$0xff]
        %v1516 = vld [vmem:[%s1505 + $0x50] sm:$0xff]
        %v1517 = vld [vmem:[%s1505 + $0x58] sm:$0xff]
        %v1518 = vld [vmem:[%s1505 + $0x60] sm:$0xff]
        %v1519 = vld [vmem:[%s1505 + $0x68] sm:$0xff]
        %v1520 = vld [vmem:[%s1505 + $0x70] sm:$0xff]
        %v1521 = vld [vmem:[%s1505 + $0x78] sm:$0xff]
        %1522 = vmatprep.subr.mxu0 0.0
        %1523 = vmatpush1.msra.mxu0 %v1506
        %1524 = vmatprep.subr.mxu0 0.0
        %1525 = vmatpush1.msra.mxu0 %v1507
        %1526 = vmatprep.subr.mxu0 0.0
        %1527 = vmatpush1.msra.mxu0 %v1508
        %1528 = vmatprep.subr.mxu0 0.0
        %1529 = vmatpush1.msra.mxu0 %v1509
        %1530 = vmatprep.subr.mxu0 0.0
        %1531 = vmatpush1.msra.mxu0 %v1510
        %1532 = vmatprep.subr.mxu0 0.0
        %1533 = vmatpush1.msra.mxu0 %v1511
        %1534 = vmatprep.subr.mxu0 0.0
        %1535 = vmatpush1.msra.mxu0 %v1512
        %1536 = vmatprep.subr.mxu0 0.0
        %1537 = vmatpush1.msra.mxu0 %v1513
        %1538 = vmatprep.subr.mxu0 0.0
        %1539 = vmatpush1.msra.mxu0 %v1514
        %1540 = vmatprep.subr.mxu0 0.0
        %1541 = vmatpush1.msra.mxu0 %v1515
        %1542 = vmatprep.subr.mxu0 0.0
        %1543 = vmatpush1.msra.mxu0 %v1516
        %1544 = vmatprep.subr.mxu0 0.0
        %1545 = vmatpush1.msra.mxu0 %v1517
        %1546 = vmatprep.subr.mxu0 0.0
        %1547 = vmatpush1.msra.mxu0 %v1518
        %1548 = vmatprep.subr.mxu0 0.0
        %1549 = vmatpush1.msra.mxu0 %v1519
        %1550 = vmatprep.subr.mxu0 0.0
        %1551 = vmatpush1.msra.mxu0 %v1520
        %1552 = vmatprep.subr.mxu0 0.0
        %1553 = vmatpush1.msra.mxu0 %v1521
        %1554 = vmatprep.subr.mxu0 0.0
        %1555 = vmatpush1.msra.mxu0 0.0
        %1556 = vmatprep.subr.mxu0 0.0
        %1557 = vmatpush1.msra.mxu0 0.0
        %1558 = vmatprep.subr.mxu0 0.0
        %1559 = vmatpush1.msra.mxu0 0.0
        %1560 = vmatprep.subr.mxu0 0.0
        %1561 = vmatpush1.msra.mxu0 0.0
        %1562 = vmatprep.subr.mxu0 0.0
        %1563 = vmatpush1.msra.mxu0 0.0
        %1564 = vmatprep.subr.mxu0 0.0
        %1565 = vmatpush1.msra.mxu0 0.0
        %1566 = vmatprep.subr.mxu0 0.0
        %1567 = vmatpush1.msra.mxu0 0.0
        %1568 = vmatprep.subr.mxu0 0.0
        %1569 = vmatpush1.msra.mxu0 0.0
        %1570 = vmatprep.subr.mxu0 0.0
        %1571 = vmatpush1.msra.mxu0 0.0
        %1572 = vmatprep.subr.mxu0 0.0
        %1573 = vmatpush1.msra.mxu0 0.0
        %1574 = vmatprep.subr.mxu0 0.0
        %1575 = vmatpush1.msra.mxu0 0.0
        %1576 = vmatprep.subr.mxu0 0.0
        %1577 = vmatpush1.msra.mxu0 0.0
        %1578 = vmatprep.subr.mxu0 0.0
        %1579 = vmatpush1.msra.mxu0 0.0
        %1580 = vmatprep.subr.mxu0 0.0
        %1581 = vmatpush1.msra.mxu0 0.0
        %1582 = vmatprep.subr.mxu0 0.0
        %1583 = vmatpush1.msra.mxu0 0.0
        %1584 = vmatprep.subr.mxu0 0.0
        %1585 = vmatpush1.msra.mxu0 0.0
        %1586 = vmatprep.mubr.f32.mxu0 0.0
        %1587 = vmatmul.mubr.f32.gmra.mrb[0].mxu0 %v1481
        %v1588 = vpop.f32.mrb[0].mxu0
        %v1589 = vadd.f32 0.0, %v1588
        %v1590 = vpop.f32.mrb[0].mxu0
        %1591 = vmatprep.mubr.f32.mxu0 0.0
        %1592 = vmatmul.mubr.f32.gmra.mrb[0].mxu0 %v1482
        %v1593 = vpop.f32.mrb[0].mxu0
        %v1594 = vadd.f32 0.0, %v1593
        %v1595 = vpop.f32.mrb[0].mxu0
        %1596 = vmatprep.mubr.f32.mxu0 0.0
        %1597 = vmatmul.mubr.f32.gmra.mrb[0].mxu0 %v1483
        %v1598 = vpop.f32.mrb[0].mxu0
        %v1599 = vadd.f32 0.0, %v1598
        %v1600 = vpop.f32.mrb[0].mxu0
        %1601 = vmatprep.mubr.f32.mxu0 0.0
        %1602 = vmatmul.mubr.f32.gmra.mrb[0].mxu0 %v1484
        %v1603 = vpop.f32.mrb[0].mxu0
        %v1604 = vadd.f32 0.0, %v1603
        %v1605 = vpop.f32.mrb[0].mxu0
        %1606 = vmatprep.mubr.f32.mxu0 0.0
        %1607 = vmatmul.mubr.f32.gmra.mrb[0].mxu0 %v1485
        %v1608 = vpop.f32.mrb[0].mxu0
        %v1609 = vadd.f32 0.0, %v1608
        %v1610 = vpop.f32.mrb[0].mxu0
        %1611 = vmatprep.mubr.f32.mxu0 0.0
        %1612 = vmatmul.mubr.f32.gmra.mrb[0].mxu0 %v1486
        %v1613 = vpop.f32.mrb[0].mxu0
        %v1614 = vadd.f32 0.0, %v1613
        %v1615 = vpop.f32.mrb[0].mxu0
        %1616 = vmatprep.mubr.f32.mxu0 0.0
        %1617 = vmatmul.mubr.f32.gmra.mrb[0].mxu0 %v1487
        %v1618 = vpop.f32.mrb[0].mxu0
        %v1619 = vadd.f32 0.0, %v1618
        %v1620 = vpop.f32.mrb[0].mxu0
        %1621 = vmatprep.mubr.f32.mxu0 0.0
        %1622 = vmatmul.mubr.f32.gmra.mrb[0].mxu0 %v1488
        %v1623 = vpop.f32.mrb[0].mxu0
        %v1624 = vadd.f32 0.0, %v1623
        %v1625 = vpop.f32.mrb[0].mxu0
        %1626 = vmatprep.mubr.f32.mxu0 0.0
        %1627 = vmatmul.mubr.f32.gmra.mrb[0].mxu0 %v1489
        %v1628 = vpop.f32.mrb[0].mxu0
        %v1629 = vadd.f32 0.0, %v1628
        %v1630 = vpop.f32.mrb[0].mxu0
        %1631 = vmatprep.mubr.f32.mxu0 0.0
        %1632 = vmatmul.mubr.f32.gmra.mrb[0].mxu0 %v1490
        %v1633 = vpop.f32.mrb[0].mxu0
        %v1634 = vadd.f32 0.0, %v1633
        %v1635 = vpop.f32.mrb[0].mxu0
        %1636 = vmatprep.mubr.f32.mxu0 0.0
        %1637 = vmatmul.mubr.f32.gmra.mrb[0].mxu0 %v1491
        %v1638 = vpop.f32.mrb[0].mxu0
        %v1639 = vadd.f32 0.0, %v1638
        %v1640 = vpop.f32.mrb[0].mxu0
        %1641 = vmatprep.mubr.f32.mxu0 0.0
        %1642 = vmatmul.mubr.f32.gmra.mrb[0].mxu0 %v1492
        %v1643 = vpop.f32.mrb[0].mxu0
        %v1644 = vadd.f32 0.0, %v1643
        %v1645 = vpop.f32.mrb[0].mxu0
        %1646 = vmatprep.mubr.f32.mxu0 0.0
        %1647 = vmatmul.mubr.f32.gmra.mrb[0].mxu0 %v1493
        %v1648 = vpop.f32.mrb[0].mxu0
        %v1649 = vadd.f32 0.0, %v1648
        %v1650 = vpop.f32.mrb[0].mxu0
        %1651 = vmatprep.mubr.f32.mxu0 0.0
        %1652 = vmatmul.mubr.f32.gmra.mrb[0].mxu0 %v1494
        %v1653 = vpop.f32.mrb[0].mxu0
        %v1654 = vadd.f32 0.0, %v1653
        %v1655 = vpop.f32.mrb[0].mxu0
        %1656 = vmatprep.mubr.f32.mxu0 0.0
        %1657 = vmatmul.mubr.f32.gmra.mrb[0].mxu0 %v1495
        %v1658 = vpop.f32.mrb[0].mxu0
        %v1659 = vadd.f32 0.0, %v1658
        %v1660 = vpop.f32.mrb[0].mxu0
        %1661 = vmatprep.mubr.f32.mxu0 0.0
        %1662 = vmatmul.mubr.f32.gmra.mrb[0].mxu0 %v1496
        %v1663 = vpop.f32.mrb[0].mxu0
        %v1664 = vadd.f32 0.0, %v1663
        %v1665 = vpop.f32.mrb[0].mxu0
        %1666 = vmatprep.mubr.f32.mxu0 0.0
        %1667 = vmatmul.mubr.f32.gmra.mrb[0].mxu0 %v1497
        %v1668 = vpop.f32.mrb[0].mxu0
        %v1669 = vadd.f32 0.0, %v1668
        %v1670 = vpop.f32.mrb[0].mxu0
        %1671 = vmatprep.mubr.f32.mxu0 0.0
        %1672 = vmatmul.mubr.f32.gmra.mrb[0].mxu0 %v1498
        %v1673 = vpop.f32.mrb[0].mxu0
        %v1674 = vadd.f32 0.0, %v1673
        %v1675 = vpop.f32.mrb[0].mxu0
        %1676 = vmatprep.mubr.f32.mxu0 0.0
        %1677 = vmatmul.mubr.f32.gmra.mrb[0].mxu0 %v1499
        %v1678 = vpop.f32.mrb[0].mxu0
        %v1679 = vadd.f32 0.0, %v1678
        %v1680 = vpop.f32.mrb[0].mxu0
        %1681 = vmatprep.mubr.f32.mxu0 0.0
        %1682 = vmatmul.mubr.f32.gmra.mrb[0].mxu0 %v1500
        %v1683 = vpop.f32.mrb[0].mxu0
        %v1684 = vadd.f32 0.0, %v1683
        %v1685 = vpop.f32.mrb[0].mxu0
        %1686 = vmatprep.mubr.f32.mxu0 0.0
        %1687 = vmatmul.mubr.f32.gmra.mrb[0].mxu0 %v1501
        %v1688 = vpop.f32.mrb[0].mxu0
        %v1689 = vadd.f32 0.0, %v1688
        %v1690 = vpop.f32.mrb[0].mxu0
        %1691 = vmatprep.mubr.f32.mxu0 0.0
        %1692 = vmatmul.mubr.f32.gmra.mrb[0].mxu0 %v1502
        %v1693 = vpop.f32.mrb[0].mxu0
        %v1694 = vadd.f32 0.0, %v1693
        %v1695 = vpop.f32.mrb[0].mxu0
        %1696 = vmatprep.mubr.f32.mxu0 0.0
        %1697 = vmatmul.mubr.f32.gmra.mrb[0].mxu0 %v1503
        %v1698 = vpop.f32.mrb[0].mxu0
        %v1699 = vadd.f32 0.0, %v1698
        %v1700 = vpop.f32.mrb[0].mxu0
        %1701 = vmatprep.mubr.f32.mxu0 0.0
        %1702 = vmatmul.mubr.f32.gmra.mrb[0].mxu0 %v1504
        %v1703 = vpop.f32.mrb[0].mxu0
        %v1704 = vadd.f32 0.0, %v1703
        %v1705 = vpop.f32.mrb[0].mxu0
        %1706 = vdwg.mxu0
        %v1707 = vadd.f32 %v1457, %v1589
        %v1708 = vadd.f32 %v1458, %v1594
        %v1709 = vadd.f32 %v1459, %v1599
        %v1710 = vadd.f32 %v1460, %v1604
        %v1711 = vadd.f32 %v1461, %v1609
        %v1712 = vadd.f32 %v1462, %v1614
        %v1713 = vadd.f32 %v1463, %v1619
        %v1714 = vadd.f32 %v1464, %v1624
        %v1715 = vadd.f32 %v1465, %v1629
        %v1716 = vadd.f32 %v1466, %v1634
        %v1717 = vadd.f32 %v1467, %v1639
        %v1718 = vadd.f32 %v1468, %v1644
        %v1719 = vadd.f32 %v1469, %v1649
        %v1720 = vadd.f32 %v1470, %v1654
        %v1721 = vadd.f32 %v1471, %v1659
        %v1722 = vadd.f32 %v1472, %v1664
        %v1723 = vadd.f32 %v1473, %v1669
        %v1724 = vadd.f32 %v1474, %v1674
        %v1725 = vadd.f32 %v1475, %v1679
        %v1726 = vadd.f32 %v1476, %v1684
        %v1727 = vadd.f32 %v1477, %v1689
        %v1728 = vadd.f32 %v1478, %v1694
        %v1729 = vadd.f32 %v1479, %v1699
        %v1730 = vadd.f32 %v1480, %v1704
        %s1731 = sadd.s32 %s219, 2
        %s1732 = smul.u32 %s1731, 24
        %s1733 = scalar_lea.vmem %s191, %s1732 [#allocation2]
        %v1734 = vld [vmem:[%s1733] sm:$0xff]
        %v1735 = vld [vmem:[%s1733 + $0x8] sm:$0xff]
        %v1736 = vld [vmem:[%s1733 + $0x18] sm:$0xff]
        %v1737 = vld [vmem:[%s1733 + $0x20] sm:$0xff]
        %v1738 = vld [vmem:[%s1733 + $0x30] sm:$0xff]
        %v1739 = vld [vmem:[%s1733 + $0x38] sm:$0xff]
        %v1740 = vld [vmem:[%s1733 + $0x48] sm:$0xff]
        %v1741 = vld [vmem:[%s1733 + $0x50] sm:$0xff]
        %v1742 = vld [vmem:[%s1733 + $0x60] sm:$0xff]
        %v1743 = vld [vmem:[%s1733 + $0x68] sm:$0xff]
        %v1744 = vld [vmem:[%s1733 + $0x78] sm:$0xff]
        %v1745 = vld [vmem:[%s1733 + $0x80] sm:$0xff]
        %v1746 = vld [vmem:[%s1733 + $0x90] sm:$0xff]
        %v1747 = vld [vmem:[%s1733 + $0x98] sm:$0xff]
        %v1748 = vld [vmem:[%s1733 + $0xa8] sm:$0xff]
        %v1749 = vld [vmem:[%s1733 + $0xb0] sm:$0xff]
        %v1750 = vld [vmem:[%s1733 + $0xc0] sm:$0xff]
        %v1751 = vld [vmem:[%s1733 + $0xc8] sm:$0xff]
        %v1752 = vld [vmem:[%s1733 + $0xd8] sm:$0xff]
        %v1753 = vld [vmem:[%s1733 + $0xe0] sm:$0xff]
        %v1754 = vld [vmem:[%s1733 + $0xf0] sm:$0xff]
        %v1755 = vld [vmem:[%s1733 + $0xf8] sm:$0xff]
        %v1756 = vld [vmem:[%s1733 + $0x108] sm:$0xff]
        %v1757 = vld [vmem:[%s1733 + $0x110] sm:$0xff]
        %s1758 = scalar_lea.vmem [#allocation5], 768
        %v1759 = vld [vmem:[%s1758] sm:$0xff]
        %v1760 = vld [vmem:[%s1758 + $0x8] sm:$0xff]
        %v1761 = vld [vmem:[%s1758 + $0x10] sm:$0xff]
        %v1762 = vld [vmem:[%s1758 + $0x18] sm:$0xff]
        %v1763 = vld [vmem:[%s1758 + $0x20] sm:$0xff]
        %v1764 = vld [vmem:[%s1758 + $0x28] sm:$0xff]
        %v1765 = vld [vmem:[%s1758 + $0x30] sm:$0xff]
        %v1766 = vld [vmem:[%s1758 + $0x38] sm:$0xff]
        %v1767 = vld [vmem:[%s1758 + $0x40] sm:$0xff]
        %v1768 = vld [vmem:[%s1758 + $0x48] sm:$0xff]
        %v1769 = vld [vmem:[%s1758 + $0x50] sm:$0xff]
        %v1770 = vld [vmem:[%s1758 + $0x58] sm:$0xff]
        %v1771 = vld [vmem:[%s1758 + $0x60] sm:$0xff]
        %v1772 = vld [vmem:[%s1758 + $0x68] sm:$0xff]
        %v1773 = vld [vmem:[%s1758 + $0x70] sm:$0xff]
        %v1774 = vld [vmem:[%s1758 + $0x78] sm:$0xff]
        %1775 = vmatprep.subr.mxu0 0.0
        %1776 = vmatpush1.msra.mxu0 %v1759
        %1777 = vmatprep.subr.mxu0 0.0
        %1778 = vmatpush1.msra.mxu0 %v1760
        %1779 = vmatprep.subr.mxu0 0.0
        %1780 = vmatpush1.msra.mxu0 %v1761
        %1781 = vmatprep.subr.mxu0 0.0
        %1782 = vmatpush1.msra.mxu0 %v1762
        %1783 = vmatprep.subr.mxu0 0.0
        %1784 = vmatpush1.msra.mxu0 %v1763
        %1785 = vmatprep.subr.mxu0 0.0
        %1786 = vmatpush1.msra.mxu0 %v1764
        %1787 = vmatprep.subr.mxu0 0.0
        %1788 = vmatpush1.msra.mxu0 %v1765
        %1789 = vmatprep.subr.mxu0 0.0
        %1790 = vmatpush1.msra.mxu0 %v1766
        %1791 = vmatprep.subr.mxu0 0.0
        %1792 = vmatpush1.msra.mxu0 %v1767
        %1793 = vmatprep.subr.mxu0 0.0
        %1794 = vmatpush1.msra.mxu0 %v1768
        %1795 = vmatprep.subr.mxu0 0.0
        %1796 = vmatpush1.msra.mxu0 %v1769
        %1797 = vmatprep.subr.mxu0 0.0
        %1798 = vmatpush1.msra.mxu0 %v1770
        %1799 = vmatprep.subr.mxu0 0.0
        %1800 = vmatpush1.msra.mxu0 %v1771
        %1801 = vmatprep.subr.mxu0 0.0
        %1802 = vmatpush1.msra.mxu0 %v1772
        %1803 = vmatprep.subr.mxu0 0.0
        %1804 = vmatpush1.msra.mxu0 %v1773
        %1805 = vmatprep.subr.mxu0 0.0
        %1806 = vmatpush1.msra.mxu0 %v1774
        %1807 = vmatprep.subr.mxu0 0.0
        %1808 = vmatpush1.msra.mxu0 0.0
        %1809 = vmatprep.subr.mxu0 0.0
        %1810 = vmatpush1.msra.mxu0 0.0
        %1811 = vmatprep.subr.mxu0 0.0
        %1812 = vmatpush1.msra.mxu0 0.0
        %1813 = vmatprep.subr.mxu0 0.0
        %1814 = vmatpush1.msra.mxu0 0.0
        %1815 = vmatprep.subr.mxu0 0.0
        %1816 = vmatpush1.msra.mxu0 0.0
        %1817 = vmatprep.subr.mxu0 0.0
        %1818 = vmatpush1.msra.mxu0 0.0
        %1819 = vmatprep.subr.mxu0 0.0
        %1820 = vmatpush1.msra.mxu0 0.0
        %1821 = vmatprep.subr.mxu0 0.0
        %1822 = vmatpush1.msra.mxu0 0.0
        %1823 = vmatprep.subr.mxu0 0.0
        %1824 = vmatpush1.msra.mxu0 0.0
        %1825 = vmatprep.subr.mxu0 0.0
        %1826 = vmatpush1.msra.mxu0 0.0
        %1827 = vmatprep.subr.mxu0 0.0
        %1828 = vmatpush1.msra.mxu0 0.0
        %1829 = vmatprep.subr.mxu0 0.0
        %1830 = vmatpush1.msra.mxu0 0.0
        %1831 = vmatprep.subr.mxu0 0.0
        %1832 = vmatpush1.msra.mxu0 0.0
        %1833 = vmatprep.subr.mxu0 0.0
        %1834 = vmatpush1.msra.mxu0 0.0
        %1835 = vmatprep.subr.mxu0 0.0
        %1836 = vmatpush1.msra.mxu0 0.0
        %1837 = vmatprep.subr.mxu0 0.0
        %1838 = vmatpush1.msra.mxu0 0.0
        %1839 = vmatprep.mubr.f32.mxu0 0.0
        %1840 = vmatmul.mubr.f32.gmra.mrb[0].mxu0 %v1734
        %v1841 = vpop.f32.mrb[0].mxu0
        %v1842 = vadd.f32 0.0, %v1841
        %v1843 = vpop.f32.mrb[0].mxu0
        %1844 = vmatprep.mubr.f32.mxu0 0.0
        %1845 = vmatmul.mubr.f32.gmra.mrb[0].mxu0 %v1735
        %v1846 = vpop.f32.mrb[0].mxu0
        %v1847 = vadd.f32 0.0, %v1846
        %v1848 = vpop.f32.mrb[0].mxu0
        %1849 = vmatprep.mubr.f32.mxu0 0.0
        %1850 = vmatmul.mubr.f32.gmra.mrb[0].mxu0 %v1736
        %v1851 = vpop.f32.mrb[0].mxu0
        %v1852 = vadd.f32 0.0, %v1851
        %v1853 = vpop.f32.mrb[0].mxu0
        %1854 = vmatprep.mubr.f32.mxu0 0.0
        %1855 = vmatmul.mubr.f32.gmra.mrb[0].mxu0 %v1737
        %v1856 = vpop.f32.mrb[0].mxu0
        %v1857 = vadd.f32 0.0, %v1856
        %v1858 = vpop.f32.mrb[0].mxu0
        %1859 = vmatprep.mubr.f32.mxu0 0.0
        %1860 = vmatmul.mubr.f32.gmra.mrb[0].mxu0 %v1738
        %v1861 = vpop.f32.mrb[0].mxu0
        %v1862 = vadd.f32 0.0, %v1861
        %v1863 = vpop.f32.mrb[0].mxu0
        %1864 = vmatprep.mubr.f32.mxu0 0.0
        %1865 = vmatmul.mubr.f32.gmra.mrb[0].mxu0 %v1739
        %v1866 = vpop.f32.mrb[0].mxu0
        %v1867 = vadd.f32 0.0, %v1866
        %v1868 = vpop.f32.mrb[0].mxu0
        %1869 = vmatprep.mubr.f32.mxu0 0.0
        %1870 = vmatmul.mubr.f32.gmra.mrb[0].mxu0 %v1740
        %v1871 = vpop.f32.mrb[0].mxu0
        %v1872 = vadd.f32 0.0, %v1871
        %v1873 = vpop.f32.mrb[0].mxu0
        %1874 = vmatprep.mubr.f32.mxu0 0.0
        %1875 = vmatmul.mubr.f32.gmra.mrb[0].mxu0 %v1741
        %v1876 = vpop.f32.mrb[0].mxu0
        %v1877 = vadd.f32 0.0, %v1876
        %v1878 = vpop.f32.mrb[0].mxu0
        %1879 = vmatprep.mubr.f32.mxu0 0.0
        %1880 = vmatmul.mubr.f32.gmra.mrb[0].mxu0 %v1742
        %v1881 = vpop.f32.mrb[0].mxu0
        %v1882 = vadd.f32 0.0, %v1881
        %v1883 = vpop.f32.mrb[0].mxu0
        %1884 = vmatprep.mubr.f32.mxu0 0.0
        %1885 = vmatmul.mubr.f32.gmra.mrb[0].mxu0 %v1743
        %v1886 = vpop.f32.mrb[0].mxu0
        %v1887 = vadd.f32 0.0, %v1886
        %v1888 = vpop.f32.mrb[0].mxu0
        %1889 = vmatprep.mubr.f32.mxu0 0.0
        %1890 = vmatmul.mubr.f32.gmra.mrb[0].mxu0 %v1744
        %v1891 = vpop.f32.mrb[0].mxu0
        %v1892 = vadd.f32 0.0, %v1891
        %v1893 = vpop.f32.mrb[0].mxu0
        %1894 = vmatprep.mubr.f32.mxu0 0.0
        %1895 = vmatmul.mubr.f32.gmra.mrb[0].mxu0 %v1745
        %v1896 = vpop.f32.mrb[0].mxu0
        %v1897 = vadd.f32 0.0, %v1896
        %v1898 = vpop.f32.mrb[0].mxu0
        %1899 = vmatprep.mubr.f32.mxu0 0.0
        %1900 = vmatmul.mubr.f32.gmra.mrb[0].mxu0 %v1746
        %v1901 = vpop.f32.mrb[0].mxu0
        %v1902 = vadd.f32 0.0, %v1901
        %v1903 = vpop.f32.mrb[0].mxu0
        %1904 = vmatprep.mubr.f32.mxu0 0.0
        %1905 = vmatmul.mubr.f32.gmra.mrb[0].mxu0 %v1747
        %v1906 = vpop.f32.mrb[0].mxu0
        %v1907 = vadd.f32 0.0, %v1906
        %v1908 = vpop.f32.mrb[0].mxu0
        %1909 = vmatprep.mubr.f32.mxu0 0.0
        %1910 = vmatmul.mubr.f32.gmra.mrb[0].mxu0 %v1748
        %v1911 = vpop.f32.mrb[0].mxu0
        %v1912 = vadd.f32 0.0, %v1911
        %v1913 = vpop.f32.mrb[0].mxu0
        %1914 = vmatprep.mubr.f32.mxu0 0.0
        %1915 = vmatmul.mubr.f32.gmra.mrb[0].mxu0 %v1749
        %v1916 = vpop.f32.mrb[0].mxu0
        %v1917 = vadd.f32 0.0, %v1916
        %v1918 = vpop.f32.mrb[0].mxu0
        %1919 = vmatprep.mubr.f32.mxu0 0.0
        %1920 = vmatmul.mubr.f32.gmra.mrb[0].mxu0 %v1750
        %v1921 = vpop.f32.mrb[0].mxu0
        %v1922 = vadd.f32 0.0, %v1921
        %v1923 = vpop.f32.mrb[0].mxu0
        %1924 = vmatprep.mubr.f32.mxu0 0.0
        %1925 = vmatmul.mubr.f32.gmra.mrb[0].mxu0 %v1751
        %v1926 = vpop.f32.mrb[0].mxu0
        %v1927 = vadd.f32 0.0, %v1926
        %v1928 = vpop.f32.mrb[0].mxu0
        %1929 = vmatprep.mubr.f32.mxu0 0.0
        %1930 = vmatmul.mubr.f32.gmra.mrb[0].mxu0 %v1752
        %v1931 = vpop.f32.mrb[0].mxu0
        %v1932 = vadd.f32 0.0, %v1931
        %v1933 = vpop.f32.mrb[0].mxu0
        %1934 = vmatprep.mubr.f32.mxu0 0.0
        %1935 = vmatmul.mubr.f32.gmra.mrb[0].mxu0 %v1753
        %v1936 = vpop.f32.mrb[0].mxu0
        %v1937 = vadd.f32 0.0, %v1936
        %v1938 = vpop.f32.mrb[0].mxu0
        %1939 = vmatprep.mubr.f32.mxu0 0.0
        %1940 = vmatmul.mubr.f32.gmra.mrb[0].mxu0 %v1754
        %v1941 = vpop.f32.mrb[0].mxu0
        %v1942 = vadd.f32 0.0, %v1941
        %v1943 = vpop.f32.mrb[0].mxu0
        %1944 = vmatprep.mubr.f32.mxu0 0.0
        %1945 = vmatmul.mubr.f32.gmra.mrb[0].mxu0 %v1755
        %v1946 = vpop.f32.mrb[0].mxu0
        %v1947 = vadd.f32 0.0, %v1946
        %v1948 = vpop.f32.mrb[0].mxu0
        %1949 = vmatprep.mubr.f32.mxu0 0.0
        %1950 = vmatmul.mubr.f32.gmra.mrb[0].mxu0 %v1756
        %v1951 = vpop.f32.mrb[0].mxu0
        %v1952 = vadd.f32 0.0, %v1951
        %v1953 = vpop.f32.mrb[0].mxu0
        %1954 = vmatprep.mubr.f32.mxu0 0.0
        %1955 = vmatmul.mubr.f32.gmra.mrb[0].mxu0 %v1757
        %v1956 = vpop.f32.mrb[0].mxu0
        %v1957 = vadd.f32 0.0, %v1956
        %v1958 = vpop.f32.mrb[0].mxu0
        %1959 = vdwg.mxu0
        %v1960 = vadd.f32 %v1707, %v1842
        %v1961 = vadd.f32 %v1708, %v1847
        %v1962 = vadd.f32 %v1709, %v1852
        %v1963 = vadd.f32 %v1710, %v1857
        %v1964 = vadd.f32 %v1711, %v1862
        %v1965 = vadd.f32 %v1712, %v1867
        %v1966 = vadd.f32 %v1713, %v1872
        %v1967 = vadd.f32 %v1714, %v1877
        %v1968 = vadd.f32 %v1715, %v1882
        %v1969 = vadd.f32 %v1716, %v1887
        %v1970 = vadd.f32 %v1717, %v1892
        %v1971 = vadd.f32 %v1718, %v1897
        %v1972 = vadd.f32 %v1719, %v1902
        %v1973 = vadd.f32 %v1720, %v1907
        %v1974 = vadd.f32 %v1721, %v1912
        %v1975 = vadd.f32 %v1722, %v1917
        %v1976 = vadd.f32 %v1723, %v1922
        %v1977 = vadd.f32 %v1724, %v1927
        %v1978 = vadd.f32 %v1725, %v1932
        %v1979 = vadd.f32 %v1726, %v1937
        %v1980 = vadd.f32 %v1727, %v1942
        %v1981 = vadd.f32 %v1728, %v1947
        %v1982 = vadd.f32 %v1729, %v1952
        %v1983 = vadd.f32 %v1730, %v1957
        %v1984 = vld [vmem:[%s1733 + $0x1] sm:$0xff]
        %v1985 = vld [vmem:[%s1733 + $0x9] sm:$0xff]
        %v1986 = vld [vmem:[%s1733 + $0x19] sm:$0xff]
        %v1987 = vld [vmem:[%s1733 + $0x21] sm:$0xff]
        %v1988 = vld [vmem:[%s1733 + $0x31] sm:$0xff]
        %v1989 = vld [vmem:[%s1733 + $0x39] sm:$0xff]
        %v1990 = vld [vmem:[%s1733 + $0x49] sm:$0xff]
        %v1991 = vld [vmem:[%s1733 + $0x51] sm:$0xff]
        %v1992 = vld [vmem:[%s1733 + $0x61] sm:$0xff]
        %v1993 = vld [vmem:[%s1733 + $0x69] sm:$0xff]
        %v1994 = vld [vmem:[%s1733 + $0x79] sm:$0xff]
        %v1995 = vld [vmem:[%s1733 + $0x81] sm:$0xff]
        %v1996 = vld [vmem:[%s1733 + $0x91] sm:$0xff]
        %v1997 = vld [vmem:[%s1733 + $0x99] sm:$0xff]
        %v1998 = vld [vmem:[%s1733 + $0xa9] sm:$0xff]
        %v1999 = vld [vmem:[%s1733 + $0xb1] sm:$0xff]
        %v2000 = vld [vmem:[%s1733 + $0xc1] sm:$0xff]
        %v2001 = vld [vmem:[%s1733 + $0xc9] sm:$0xff]
        %v2002 = vld [vmem:[%s1733 + $0xd9] sm:$0xff]
        %v2003 = vld [vmem:[%s1733 + $0xe1] sm:$0xff]
        %v2004 = vld [vmem:[%s1733 + $0xf1] sm:$0xff]
        %v2005 = vld [vmem:[%s1733 + $0xf9] sm:$0xff]
        %v2006 = vld [vmem:[%s1733 + $0x109] sm:$0xff]
        %v2007 = vld [vmem:[%s1733 + $0x111] sm:$0xff]
        %s2008 = scalar_lea.vmem [#allocation5], 896
        %v2009 = vld [vmem:[%s2008] sm:$0xff]
        %v2010 = vld [vmem:[%s2008 + $0x8] sm:$0xff]
        %v2011 = vld [vmem:[%s2008 + $0x10] sm:$0xff]
        %v2012 = vld [vmem:[%s2008 + $0x18] sm:$0xff]
        %v2013 = vld [vmem:[%s2008 + $0x20] sm:$0xff]
        %v2014 = vld [vmem:[%s2008 + $0x28] sm:$0xff]
        %v2015 = vld [vmem:[%s2008 + $0x30] sm:$0xff]
        %v2016 = vld [vmem:[%s2008 + $0x38] sm:$0xff]
        %v2017 = vld [vmem:[%s2008 + $0x40] sm:$0xff]
        %v2018 = vld [vmem:[%s2008 + $0x48] sm:$0xff]
        %v2019 = vld [vmem:[%s2008 + $0x50] sm:$0xff]
        %v2020 = vld [vmem:[%s2008 + $0x58] sm:$0xff]
        %v2021 = vld [vmem:[%s2008 + $0x60] sm:$0xff]
        %v2022 = vld [vmem:[%s2008 + $0x68] sm:$0xff]
        %v2023 = vld [vmem:[%s2008 + $0x70] sm:$0xff]
        %v2024 = vld [vmem:[%s2008 + $0x78] sm:$0xff]
        %2025 = vmatprep.subr.mxu0 0.0
        %2026 = vmatpush1.msra.mxu0 %v2009
        %2027 = vmatprep.subr.mxu0 0.0
        %2028 = vmatpush1.msra.mxu0 %v2010
        %2029 = vmatprep.subr.mxu0 0.0
        %2030 = vmatpush1.msra.mxu0 %v2011
        %2031 = vmatprep.subr.mxu0 0.0
        %2032 = vmatpush1.msra.mxu0 %v2012
        %2033 = vmatprep.subr.mxu0 0.0
        %2034 = vmatpush1.msra.mxu0 %v2013
        %2035 = vmatprep.subr.mxu0 0.0
        %2036 = vmatpush1.msra.mxu0 %v2014
        %2037 = vmatprep.subr.mxu0 0.0
        %2038 = vmatpush1.msra.mxu0 %v2015
        %2039 = vmatprep.subr.mxu0 0.0
        %2040 = vmatpush1.msra.mxu0 %v2016
        %2041 = vmatprep.subr.mxu0 0.0
        %2042 = vmatpush1.msra.mxu0 %v2017
        %2043 = vmatprep.subr.mxu0 0.0
        %2044 = vmatpush1.msra.mxu0 %v2018
        %2045 = vmatprep.subr.mxu0 0.0
        %2046 = vmatpush1.msra.mxu0 %v2019
        %2047 = vmatprep.subr.mxu0 0.0
        %2048 = vmatpush1.msra.mxu0 %v2020
        %2049 = vmatprep.subr.mxu0 0.0
        %2050 = vmatpush1.msra.mxu0 %v2021
        %2051 = vmatprep.subr.mxu0 0.0
        %2052 = vmatpush1.msra.mxu0 %v2022
        %2053 = vmatprep.subr.mxu0 0.0
        %2054 = vmatpush1.msra.mxu0 %v2023
        %2055 = vmatprep.subr.mxu0 0.0
        %2056 = vmatpush1.msra.mxu0 %v2024
        %2057 = vmatprep.subr.mxu0 0.0
        %2058 = vmatpush1.msra.mxu0 0.0
        %2059 = vmatprep.subr.mxu0 0.0
        %2060 = vmatpush1.msra.mxu0 0.0
        %2061 = vmatprep.subr.mxu0 0.0
        %2062 = vmatpush1.msra.mxu0 0.0
        %2063 = vmatprep.subr.mxu0 0.0
        %2064 = vmatpush1.msra.mxu0 0.0
        %2065 = vmatprep.subr.mxu0 0.0
        %2066 = vmatpush1.msra.mxu0 0.0
        %2067 = vmatprep.subr.mxu0 0.0
        %2068 = vmatpush1.msra.mxu0 0.0
        %2069 = vmatprep.subr.mxu0 0.0
        %2070 = vmatpush1.msra.mxu0 0.0
        %2071 = vmatprep.subr.mxu0 0.0
        %2072 = vmatpush1.msra.mxu0 0.0
        %2073 = vmatprep.subr.mxu0 0.0
        %2074 = vmatpush1.msra.mxu0 0.0
        %2075 = vmatprep.subr.mxu0 0.0
        %2076 = vmatpush1.msra.mxu0 0.0
        %2077 = vmatprep.subr.mxu0 0.0
        %2078 = vmatpush1.msra.mxu0 0.0
        %2079 = vmatprep.subr.mxu0 0.0
        %2080 = vmatpush1.msra.mxu0 0.0
        %2081 = vmatprep.subr.mxu0 0.0
        %2082 = vmatpush1.msra.mxu0 0.0
        %2083 = vmatprep.subr.mxu0 0.0
        %2084 = vmatpush1.msra.mxu0 0.0
        %2085 = vmatprep.subr.mxu0 0.0
        %2086 = vmatpush1.msra.mxu0 0.0
        %2087 = vmatprep.subr.mxu0 0.0
        %2088 = vmatpush1.msra.mxu0 0.0
        %2089 = vmatprep.mubr.f32.mxu0 0.0
        %2090 = vmatmul.mubr.f32.gmra.mrb[0].mxu0 %v1984
        %v2091 = vpop.f32.mrb[0].mxu0
        %v2092 = vadd.f32 0.0, %v2091
        %v2093 = vpop.f32.mrb[0].mxu0
        %2094 = vmatprep.mubr.f32.mxu0 0.0
        %2095 = vmatmul.mubr.f32.gmra.mrb[0].mxu0 %v1985
        %v2096 = vpop.f32.mrb[0].mxu0
        %v2097 = vadd.f32 0.0, %v2096
        %v2098 = vpop.f32.mrb[0].mxu0
        %2099 = vmatprep.mubr.f32.mxu0 0.0
        %2100 = vmatmul.mubr.f32.gmra.mrb[0].mxu0 %v1986
        %v2101 = vpop.f32.mrb[0].mxu0
        %v2102 = vadd.f32 0.0, %v2101
        %v2103 = vpop.f32.mrb[0].mxu0
        %2104 = vmatprep.mubr.f32.mxu0 0.0
        %2105 = vmatmul.mubr.f32.gmra.mrb[0].mxu0 %v1987
        %v2106 = vpop.f32.mrb[0].mxu0
        %v2107 = vadd.f32 0.0, %v2106
        %v2108 = vpop.f32.mrb[0].mxu0
        %2109 = vmatprep.mubr.f32.mxu0 0.0
        %2110 = vmatmul.mubr.f32.gmra.mrb[0].mxu0 %v1988
        %v2111 = vpop.f32.mrb[0].mxu0
        %v2112 = vadd.f32 0.0, %v2111
        %v2113 = vpop.f32.mrb[0].mxu0
        %2114 = vmatprep.mubr.f32.mxu0 0.0
        %2115 = vmatmul.mubr.f32.gmra.mrb[0].mxu0 %v1989
        %v2116 = vpop.f32.mrb[0].mxu0
        %v2117 = vadd.f32 0.0, %v2116
        %v2118 = vpop.f32.mrb[0].mxu0
        %2119 = vmatprep.mubr.f32.mxu0 0.0
        %2120 = vmatmul.mubr.f32.gmra.mrb[0].mxu0 %v1990
        %v2121 = vpop.f32.mrb[0].mxu0
        %v2122 = vadd.f32 0.0, %v2121
        %v2123 = vpop.f32.mrb[0].mxu0
        %2124 = vmatprep.mubr.f32.mxu0 0.0
        %2125 = vmatmul.mubr.f32.gmra.mrb[0].mxu0 %v1991
        %v2126 = vpop.f32.mrb[0].mxu0
        %v2127 = vadd.f32 0.0, %v2126
        %v2128 = vpop.f32.mrb[0].mxu0
        %2129 = vmatprep.mubr.f32.mxu0 0.0
        %2130 = vmatmul.mubr.f32.gmra.mrb[0].mxu0 %v1992
        %v2131 = vpop.f32.mrb[0].mxu0
        %v2132 = vadd.f32 0.0, %v2131
        %v2133 = vpop.f32.mrb[0].mxu0
        %2134 = vmatprep.mubr.f32.mxu0 0.0
        %2135 = vmatmul.mubr.f32.gmra.mrb[0].mxu0 %v1993
        %v2136 = vpop.f32.mrb[0].mxu0
        %v2137 = vadd.f32 0.0, %v2136
        %v2138 = vpop.f32.mrb[0].mxu0
        %2139 = vmatprep.mubr.f32.mxu0 0.0
        %2140 = vmatmul.mubr.f32.gmra.mrb[0].mxu0 %v1994
        %v2141 = vpop.f32.mrb[0].mxu0
        %v2142 = vadd.f32 0.0, %v2141
        %v2143 = vpop.f32.mrb[0].mxu0
        %2144 = vmatprep.mubr.f32.mxu0 0.0
        %2145 = vmatmul.mubr.f32.gmra.mrb[0].mxu0 %v1995
        %v2146 = vpop.f32.mrb[0].mxu0
        %v2147 = vadd.f32 0.0, %v2146
        %v2148 = vpop.f32.mrb[0].mxu0
        %2149 = vmatprep.mubr.f32.mxu0 0.0
        %2150 = vmatmul.mubr.f32.gmra.mrb[0].mxu0 %v1996
        %v2151 = vpop.f32.mrb[0].mxu0
        %v2152 = vadd.f32 0.0, %v2151
        %v2153 = vpop.f32.mrb[0].mxu0
        %2154 = vmatprep.mubr.f32.mxu0 0.0
        %2155 = vmatmul.mubr.f32.gmra.mrb[0].mxu0 %v1997
        %v2156 = vpop.f32.mrb[0].mxu0
        %v2157 = vadd.f32 0.0, %v2156
        %v2158 = vpop.f32.mrb[0].mxu0
        %2159 = vmatprep.mubr.f32.mxu0 0.0
        %2160 = vmatmul.mubr.f32.gmra.mrb[0].mxu0 %v1998
        %v2161 = vpop.f32.mrb[0].mxu0
        %v2162 = vadd.f32 0.0, %v2161
        %v2163 = vpop.f32.mrb[0].mxu0
        %2164 = vmatprep.mubr.f32.mxu0 0.0
        %2165 = vmatmul.mubr.f32.gmra.mrb[0].mxu0 %v1999
        %v2166 = vpop.f32.mrb[0].mxu0
        %v2167 = vadd.f32 0.0, %v2166
        %v2168 = vpop.f32.mrb[0].mxu0
        %2169 = vmatprep.mubr.f32.mxu0 0.0
        %2170 = vmatmul.mubr.f32.gmra.mrb[0].mxu0 %v2000
        %v2171 = vpop.f32.mrb[0].mxu0
        %v2172 = vadd.f32 0.0, %v2171
        %v2173 = vpop.f32.mrb[0].mxu0
        %2174 = vmatprep.mubr.f32.mxu0 0.0
        %2175 = vmatmul.mubr.f32.gmra.mrb[0].mxu0 %v2001
        %v2176 = vpop.f32.mrb[0].mxu0
        %v2177 = vadd.f32 0.0, %v2176
        %v2178 = vpop.f32.mrb[0].mxu0
        %2179 = vmatprep.mubr.f32.mxu0 0.0
        %2180 = vmatmul.mubr.f32.gmra.mrb[0].mxu0 %v2002
        %v2181 = vpop.f32.mrb[0].mxu0
        %v2182 = vadd.f32 0.0, %v2181
        %v2183 = vpop.f32.mrb[0].mxu0
        %2184 = vmatprep.mubr.f32.mxu0 0.0
        %2185 = vmatmul.mubr.f32.gmra.mrb[0].mxu0 %v2003
        %v2186 = vpop.f32.mrb[0].mxu0
        %v2187 = vadd.f32 0.0, %v2186
        %v2188 = vpop.f32.mrb[0].mxu0
        %2189 = vmatprep.mubr.f32.mxu0 0.0
        %2190 = vmatmul.mubr.f32.gmra.mrb[0].mxu0 %v2004
        %v2191 = vpop.f32.mrb[0].mxu0
        %v2192 = vadd.f32 0.0, %v2191
        %v2193 = vpop.f32.mrb[0].mxu0
        %2194 = vmatprep.mubr.f32.mxu0 0.0
        %2195 = vmatmul.mubr.f32.gmra.mrb[0].mxu0 %v2005
        %v2196 = vpop.f32.mrb[0].mxu0
        %v2197 = vadd.f32 0.0, %v2196
        %v2198 = vpop.f32.mrb[0].mxu0
        %2199 = vmatprep.mubr.f32.mxu0 0.0
        %2200 = vmatmul.mubr.f32.gmra.mrb[0].mxu0 %v2006
        %v2201 = vpop.f32.mrb[0].mxu0
        %v2202 = vadd.f32 0.0, %v2201
        %v2203 = vpop.f32.mrb[0].mxu0
        %2204 = vmatprep.mubr.f32.mxu0 0.0
        %2205 = vmatmul.mubr.f32.gmra.mrb[0].mxu0 %v2007
        %v2206 = vpop.f32.mrb[0].mxu0
        %v2207 = vadd.f32 0.0, %v2206
        %v2208 = vpop.f32.mrb[0].mxu0
        %2209 = vdwg.mxu0
        %v2210 = vadd.f32 %v1960, %v2092
        %v2211 = vadd.f32 %v1961, %v2097
        %v2212 = vadd.f32 %v1962, %v2102
        %v2213 = vadd.f32 %v1963, %v2107
        %v2214 = vadd.f32 %v1964, %v2112
        %v2215 = vadd.f32 %v1965, %v2117
        %v2216 = vadd.f32 %v1966, %v2122
        %v2217 = vadd.f32 %v1967, %v2127
        %v2218 = vadd.f32 %v1968, %v2132
        %v2219 = vadd.f32 %v1969, %v2137
        %v2220 = vadd.f32 %v1970, %v2142
        %v2221 = vadd.f32 %v1971, %v2147
        %v2222 = vadd.f32 %v1972, %v2152
        %v2223 = vadd.f32 %v1973, %v2157
        %v2224 = vadd.f32 %v1974, %v2162
        %v2225 = vadd.f32 %v1975, %v2167
        %v2226 = vadd.f32 %v1976, %v2172
        %v2227 = vadd.f32 %v1977, %v2177
        %v2228 = vadd.f32 %v1978, %v2182
        %v2229 = vadd.f32 %v1979, %v2187
        %v2230 = vadd.f32 %v1980, %v2192
        %v2231 = vadd.f32 %v1981, %v2197
        %v2232 = vadd.f32 %v1982, %v2202
        %v2233 = vadd.f32 %v1983, %v2207
        %v2234 = vld [vmem:[%s1733 + $0x2] sm:$0xff]
        %v2235 = vld [vmem:[%s1733 + $0xa] sm:$0xff]
        %v2236 = vld [vmem:[%s1733 + $0x1a] sm:$0xff]
        %v2237 = vld [vmem:[%s1733 + $0x22] sm:$0xff]
        %v2238 = vld [vmem:[%s1733 + $0x32] sm:$0xff]
        %v2239 = vld [vmem:[%s1733 + $0x3a] sm:$0xff]
        %v2240 = vld [vmem:[%s1733 + $0x4a] sm:$0xff]
        %v2241 = vld [vmem:[%s1733 + $0x52] sm:$0xff]
        %v2242 = vld [vmem:[%s1733 + $0x62] sm:$0xff]
        %v2243 = vld [vmem:[%s1733 + $0x6a] sm:$0xff]
        %v2244 = vld [vmem:[%s1733 + $0x7a] sm:$0xff]
        %v2245 = vld [vmem:[%s1733 + $0x82] sm:$0xff]
        %v2246 = vld [vmem:[%s1733 + $0x92] sm:$0xff]
        %v2247 = vld [vmem:[%s1733 + $0x9a] sm:$0xff]
        %v2248 = vld [vmem:[%s1733 + $0xaa] sm:$0xff]
        %v2249 = vld [vmem:[%s1733 + $0xb2] sm:$0xff]
        %v2250 = vld [vmem:[%s1733 + $0xc2] sm:$0xff]
        %v2251 = vld [vmem:[%s1733 + $0xca] sm:$0xff]
        %v2252 = vld [vmem:[%s1733 + $0xda] sm:$0xff]
        %v2253 = vld [vmem:[%s1733 + $0xe2] sm:$0xff]
        %v2254 = vld [vmem:[%s1733 + $0xf2] sm:$0xff]
        %v2255 = vld [vmem:[%s1733 + $0xfa] sm:$0xff]
        %v2256 = vld [vmem:[%s1733 + $0x10a] sm:$0xff]
        %v2257 = vld [vmem:[%s1733 + $0x112] sm:$0xff]
        %s2258 = scalar_lea.vmem [#allocation5], 1024
        %v2259 = vld [vmem:[%s2258] sm:$0xff]
        %v2260 = vld [vmem:[%s2258 + $0x8] sm:$0xff]
        %v2261 = vld [vmem:[%s2258 + $0x10] sm:$0xff]
        %v2262 = vld [vmem:[%s2258 + $0x18] sm:$0xff]
        %v2263 = vld [vmem:[%s2258 + $0x20] sm:$0xff]
        %v2264 = vld [vmem:[%s2258 + $0x28] sm:$0xff]
        %v2265 = vld [vmem:[%s2258 + $0x30] sm:$0xff]
        %v2266 = vld [vmem:[%s2258 + $0x38] sm:$0xff]
        %v2267 = vld [vmem:[%s2258 + $0x40] sm:$0xff]
        %v2268 = vld [vmem:[%s2258 + $0x48] sm:$0xff]
        %v2269 = vld [vmem:[%s2258 + $0x50] sm:$0xff]
        %v2270 = vld [vmem:[%s2258 + $0x58] sm:$0xff]
        %v2271 = vld [vmem:[%s2258 + $0x60] sm:$0xff]
        %v2272 = vld [vmem:[%s2258 + $0x68] sm:$0xff]
        %v2273 = vld [vmem:[%s2258 + $0x70] sm:$0xff]
        %v2274 = vld [vmem:[%s2258 + $0x78] sm:$0xff]
        %2275 = vmatprep.subr.mxu0 0.0
        %2276 = vmatpush1.msra.mxu0 %v2259
        %2277 = vmatprep.subr.mxu0 0.0
        %2278 = vmatpush1.msra.mxu0 %v2260
        %2279 = vmatprep.subr.mxu0 0.0
        %2280 = vmatpush1.msra.mxu0 %v2261
        %2281 = vmatprep.subr.mxu0 0.0
        %2282 = vmatpush1.msra.mxu0 %v2262
        %2283 = vmatprep.subr.mxu0 0.0
        %2284 = vmatpush1.msra.mxu0 %v2263
        %2285 = vmatprep.subr.mxu0 0.0
        %2286 = vmatpush1.msra.mxu0 %v2264
        %2287 = vmatprep.subr.mxu0 0.0
        %2288 = vmatpush1.msra.mxu0 %v2265
        %2289 = vmatprep.subr.mxu0 0.0
        %2290 = vmatpush1.msra.mxu0 %v2266
        %2291 = vmatprep.subr.mxu0 0.0
        %2292 = vmatpush1.msra.mxu0 %v2267
        %2293 = vmatprep.subr.mxu0 0.0
        %2294 = vmatpush1.msra.mxu0 %v2268
        %2295 = vmatprep.subr.mxu0 0.0
        %2296 = vmatpush1.msra.mxu0 %v2269
        %2297 = vmatprep.subr.mxu0 0.0
        %2298 = vmatpush1.msra.mxu0 %v2270
        %2299 = vmatprep.subr.mxu0 0.0
        %2300 = vmatpush1.msra.mxu0 %v2271
        %2301 = vmatprep.subr.mxu0 0.0
        %2302 = vmatpush1.msra.mxu0 %v2272
        %2303 = vmatprep.subr.mxu0 0.0
        %2304 = vmatpush1.msra.mxu0 %v2273
        %2305 = vmatprep.subr.mxu0 0.0
        %2306 = vmatpush1.msra.mxu0 %v2274
        %2307 = vmatprep.subr.mxu0 0.0
        %2308 = vmatpush1.msra.mxu0 0.0
        %2309 = vmatprep.subr.mxu0 0.0
        %2310 = vmatpush1.msra.mxu0 0.0
        %2311 = vmatprep.subr.mxu0 0.0
        %2312 = vmatpush1.msra.mxu0 0.0
        %2313 = vmatprep.subr.mxu0 0.0
        %2314 = vmatpush1.msra.mxu0 0.0
        %2315 = vmatprep.subr.mxu0 0.0
        %2316 = vmatpush1.msra.mxu0 0.0
        %2317 = vmatprep.subr.mxu0 0.0
        %2318 = vmatpush1.msra.mxu0 0.0
        %2319 = vmatprep.subr.mxu0 0.0
        %2320 = vmatpush1.msra.mxu0 0.0
        %2321 = vmatprep.subr.mxu0 0.0
        %2322 = vmatpush1.msra.mxu0 0.0
        %2323 = vmatprep.subr.mxu0 0.0
        %2324 = vmatpush1.msra.mxu0 0.0
        %2325 = vmatprep.subr.mxu0 0.0
        %2326 = vmatpush1.msra.mxu0 0.0
        %2327 = vmatprep.subr.mxu0 0.0
        %2328 = vmatpush1.msra.mxu0 0.0
        %2329 = vmatprep.subr.mxu0 0.0
        %2330 = vmatpush1.msra.mxu0 0.0
        %2331 = vmatprep.subr.mxu0 0.0
        %2332 = vmatpush1.msra.mxu0 0.0
        %2333 = vmatprep.subr.mxu0 0.0
        %2334 = vmatpush1.msra.mxu0 0.0
        %2335 = vmatprep.subr.mxu0 0.0
        %2336 = vmatpush1.msra.mxu0 0.0
        %2337 = vmatprep.subr.mxu0 0.0
        %2338 = vmatpush1.msra.mxu0 0.0
        %2339 = vmatprep.mubr.f32.mxu0 0.0
        %2340 = vmatmul.mubr.f32.gmra.mrb[0].mxu0 %v2234
        %v2341 = vpop.f32.mrb[0].mxu0
        %v2342 = vadd.f32 0.0, %v2341
        %v2343 = vpop.f32.mrb[0].mxu0
        %2344 = vmatprep.mubr.f32.mxu0 0.0
        %2345 = vmatmul.mubr.f32.gmra.mrb[0].mxu0 %v2235
        %v2346 = vpop.f32.mrb[0].mxu0
        %v2347 = vadd.f32 0.0, %v2346
        %v2348 = vpop.f32.mrb[0].mxu0
        %2349 = vmatprep.mubr.f32.mxu0 0.0
        %2350 = vmatmul.mubr.f32.gmra.mrb[0].mxu0 %v2236
        %v2351 = vpop.f32.mrb[0].mxu0
        %v2352 = vadd.f32 0.0, %v2351
        %v2353 = vpop.f32.mrb[0].mxu0
        %2354 = vmatprep.mubr.f32.mxu0 0.0
        %2355 = vmatmul.mubr.f32.gmra.mrb[0].mxu0 %v2237
        %v2356 = vpop.f32.mrb[0].mxu0
        %v2357 = vadd.f32 0.0, %v2356
        %v2358 = vpop.f32.mrb[0].mxu0
        %2359 = vmatprep.mubr.f32.mxu0 0.0
        %2360 = vmatmul.mubr.f32.gmra.mrb[0].mxu0 %v2238
        %v2361 = vpop.f32.mrb[0].mxu0
        %v2362 = vadd.f32 0.0, %v2361
        %v2363 = vpop.f32.mrb[0].mxu0
        %2364 = vmatprep.mubr.f32.mxu0 0.0
        %2365 = vmatmul.mubr.f32.gmra.mrb[0].mxu0 %v2239
        %v2366 = vpop.f32.mrb[0].mxu0
        %v2367 = vadd.f32 0.0, %v2366
        %v2368 = vpop.f32.mrb[0].mxu0
        %2369 = vmatprep.mubr.f32.mxu0 0.0
        %2370 = vmatmul.mubr.f32.gmra.mrb[0].mxu0 %v2240
        %v2371 = vpop.f32.mrb[0].mxu0
        %v2372 = vadd.f32 0.0, %v2371
        %v2373 = vpop.f32.mrb[0].mxu0
        %2374 = vmatprep.mubr.f32.mxu0 0.0
        %2375 = vmatmul.mubr.f32.gmra.mrb[0].mxu0 %v2241
        %v2376 = vpop.f32.mrb[0].mxu0
        %v2377 = vadd.f32 0.0, %v2376
        %v2378 = vpop.f32.mrb[0].mxu0
        %2379 = vmatprep.mubr.f32.mxu0 0.0
        %2380 = vmatmul.mubr.f32.gmra.mrb[0].mxu0 %v2242
        %v2381 = vpop.f32.mrb[0].mxu0
        %v2382 = vadd.f32 0.0, %v2381
        %v2383 = vpop.f32.mrb[0].mxu0
        %2384 = vmatprep.mubr.f32.mxu0 0.0
        %2385 = vmatmul.mubr.f32.gmra.mrb[0].mxu0 %v2243
        %v2386 = vpop.f32.mrb[0].mxu0
        %v2387 = vadd.f32 0.0, %v2386
        %v2388 = vpop.f32.mrb[0].mxu0
        %2389 = vmatprep.mubr.f32.mxu0 0.0
        %2390 = vmatmul.mubr.f32.gmra.mrb[0].mxu0 %v2244
        %v2391 = vpop.f32.mrb[0].mxu0
        %v2392 = vadd.f32 0.0, %v2391
        %v2393 = vpop.f32.mrb[0].mxu0
        %2394 = vmatprep.mubr.f32.mxu0 0.0
        %2395 = vmatmul.mubr.f32.gmra.mrb[0].mxu0 %v2245
        %v2396 = vpop.f32.mrb[0].mxu0
        %v2397 = vadd.f32 0.0, %v2396
        %v2398 = vpop.f32.mrb[0].mxu0
        %2399 = vmatprep.mubr.f32.mxu0 0.0
        %2400 = vmatmul.mubr.f32.gmra.mrb[0].mxu0 %v2246
        %v2401 = vpop.f32.mrb[0].mxu0
        %v2402 = vadd.f32 0.0, %v2401
        %v2403 = vpop.f32.mrb[0].mxu0
        %2404 = vmatprep.mubr.f32.mxu0 0.0
        %2405 = vmatmul.mubr.f32.gmra.mrb[0].mxu0 %v2247
        %v2406 = vpop.f32.mrb[0].mxu0
        %v2407 = vadd.f32 0.0, %v2406
        %v2408 = vpop.f32.mrb[0].mxu0
        %2409 = vmatprep.mubr.f32.mxu0 0.0
        %2410 = vmatmul.mubr.f32.gmra.mrb[0].mxu0 %v2248
        %v2411 = vpop.f32.mrb[0].mxu0
        %v2412 = vadd.f32 0.0, %v2411
        %v2413 = vpop.f32.mrb[0].mxu0
        %2414 = vmatprep.mubr.f32.mxu0 0.0
        %2415 = vmatmul.mubr.f32.gmra.mrb[0].mxu0 %v2249
        %v2416 = vpop.f32.mrb[0].mxu0
        %v2417 = vadd.f32 0.0, %v2416
        %v2418 = vpop.f32.mrb[0].mxu0
        %2419 = vmatprep.mubr.f32.mxu0 0.0
        %2420 = vmatmul.mubr.f32.gmra.mrb[0].mxu0 %v2250
        %v2421 = vpop.f32.mrb[0].mxu0
        %v2422 = vadd.f32 0.0, %v2421
        %v2423 = vpop.f32.mrb[0].mxu0
        %2424 = vmatprep.mubr.f32.mxu0 0.0
        %2425 = vmatmul.mubr.f32.gmra.mrb[0].mxu0 %v2251
        %v2426 = vpop.f32.mrb[0].mxu0
        %v2427 = vadd.f32 0.0, %v2426
        %v2428 = vpop.f32.mrb[0].mxu0
        %2429 = vmatprep.mubr.f32.mxu0 0.0
        %2430 = vmatmul.mubr.f32.gmra.mrb[0].mxu0 %v2252
        %v2431 = vpop.f32.mrb[0].mxu0
        %v2432 = vadd.f32 0.0, %v2431
        %v2433 = vpop.f32.mrb[0].mxu0
        %2434 = vmatprep.mubr.f32.mxu0 0.0
        %2435 = vmatmul.mubr.f32.gmra.mrb[0].mxu0 %v2253
        %v2436 = vpop.f32.mrb[0].mxu0
        %v2437 = vadd.f32 0.0, %v2436
        %v2438 = vpop.f32.mrb[0].mxu0
        %2439 = vmatprep.mubr.f32.mxu0 0.0
        %2440 = vmatmul.mubr.f32.gmra.mrb[0].mxu0 %v2254
        %v2441 = vpop.f32.mrb[0].mxu0
        %v2442 = vadd.f32 0.0, %v2441
        %v2443 = vpop.f32.mrb[0].mxu0
        %2444 = vmatprep.mubr.f32.mxu0 0.0
        %2445 = vmatmul.mubr.f32.gmra.mrb[0].mxu0 %v2255
        %v2446 = vpop.f32.mrb[0].mxu0
        %v2447 = vadd.f32 0.0, %v2446
        %v2448 = vpop.f32.mrb[0].mxu0
        %2449 = vmatprep.mubr.f32.mxu0 0.0
        %2450 = vmatmul.mubr.f32.gmra.mrb[0].mxu0 %v2256
        %v2451 = vpop.f32.mrb[0].mxu0
        %v2452 = vadd.f32 0.0, %v2451
        %v2453 = vpop.f32.mrb[0].mxu0
        %2454 = vmatprep.mubr.f32.mxu0 0.0
        %2455 = vmatmul.mubr.f32.gmra.mrb[0].mxu0 %v2257
        %v2456 = vpop.f32.mrb[0].mxu0
        %v2457 = vadd.f32 0.0, %v2456
        %v2458 = vpop.f32.mrb[0].mxu0
        %2459 = vdwg.mxu0
        %v2460 = vadd.f32 %v2210, %v2342
        %v2461 = vadd.f32 %v2211, %v2347
        %v2462 = vadd.f32 %v2212, %v2352
        %v2463 = vadd.f32 %v2213, %v2357
        %v2464 = vadd.f32 %v2214, %v2362
        %v2465 = vadd.f32 %v2215, %v2367
        %v2466 = vadd.f32 %v2216, %v2372
        %v2467 = vadd.f32 %v2217, %v2377
        %v2468 = vadd.f32 %v2218, %v2382
        %v2469 = vadd.f32 %v2219, %v2387
        %v2470 = vadd.f32 %v2220, %v2392
        %v2471 = vadd.f32 %v2221, %v2397
        %v2472 = vadd.f32 %v2222, %v2402
        %v2473 = vadd.f32 %v2223, %v2407
        %v2474 = vadd.f32 %v2224, %v2412
        %v2475 = vadd.f32 %v2225, %v2417
        %v2476 = vadd.f32 %v2226, %v2422
        %v2477 = vadd.f32 %v2227, %v2427
        %v2478 = vadd.f32 %v2228, %v2432
        %v2479 = vadd.f32 %v2229, %v2437
        %v2480 = vadd.f32 %v2230, %v2442
        %v2481 = vadd.f32 %v2231, %v2447
        %v2482 = vadd.f32 %v2232, %v2452
        %v2483 = vadd.f32 %v2233, %v2457
        %2484 = vst [vmem:[%s217] sm:$0xff] %v2460
        %2485 = vst [vmem:[%s217 + $0x8] sm:$0xff] %v2461
        %2486 = vst [vmem:[%s217 + $0x10] sm:$0xff] %v2462
        %2487 = vst [vmem:[%s217 + $0x18] sm:$0xff] %v2463
        %2488 = vst [vmem:[%s217 + $0x20] sm:$0xff] %v2464
        %2489 = vst [vmem:[%s217 + $0x28] sm:$0xff] %v2465
        %2490 = vst [vmem:[%s217 + $0x30] sm:$0xff] %v2466
        %2491 = vst [vmem:[%s217 + $0x38] sm:$0xff] %v2467
        %2492 = vst [vmem:[%s217 + $0x40] sm:$0xff] %v2468
        %2493 = vst [vmem:[%s217 + $0x48] sm:$0xff] %v2469
        %2494 = vst [vmem:[%s217 + $0x50] sm:$0xff] %v2470
        %2495 = vst [vmem:[%s217 + $0x58] sm:$0xff] %v2471
        %2496 = vst [vmem:[%s217 + $0x60] sm:$0xff] %v2472
        %2497 = vst [vmem:[%s217 + $0x68] sm:$0xff] %v2473
        %2498 = vst [vmem:[%s217 + $0x70] sm:$0xff] %v2474
        %2499 = vst [vmem:[%s217 + $0x78] sm:$0xff] %v2475
        %2500 = vst [vmem:[%s217 + $0x80] sm:$0xff] %v2476
        %2501 = vst [vmem:[%s217 + $0x88] sm:$0xff] %v2477
        %2502 = vst [vmem:[%s217 + $0x90] sm:$0xff] %v2478
        %2503 = vst [vmem:[%s217 + $0x98] sm:$0xff] %v2479
        %2504 = vst [vmem:[%s217 + $0xa0] sm:$0xff] %v2480
        %2505 = vst [vmem:[%s217 + $0xa8] sm:$0xff] %v2481
        %2506 = vst [vmem:[%s217 + $0xb0] sm:$0xff] %v2482
        %2507 = vst [vmem:[%s217 + $0xb8] sm:$0xff] %v2483
        %s2508 = sand.u32 %s111, 1
        %s2509 = scalar_lea.sflag [#allocation4], %s2508
        %s2510 = sand.u32 %s111, 1
        %s2511 = smul.addr %s2510, 192
        %s2512 = scalar_lea.vmem [#allocation7], %s2511
        // Predicated region
        $region41: #{tpu_custom_call.1} parent=31 // pred_check
          %p2513 = pneg %p121
        $region42: #{tpu_custom_call.1} parent=31 // pred_check_branch
          %2515 = sbr.rel (%p2513) target = $region44
        $region43: #{tpu_custom_call.1} parent=31 // pred_region
          %s2516 = smul.u32 12, %s26
          %s2518 = ssub.s32 3072, 3072
          %2519 = vsyncadd %s2509, %s2518
          %s2520 = smul.addr %s2516, 2
          %s2521 = smul.addr %s25, 48
          %s2522 = sadd.s32 %s2520, %s2521
          %s2523 = smul.addr %s2522, 128
          %s2524 = scalar_lea.hbm %s3, %s2523
          %s2525 = sshll.u32 %s2512, 4
          %s2526 = int_to_ptr.vmem [resolvable:$true] %s2525
          %2531 = dma.vmem_to_hbm [thread:$0]  %s2526, 3072, %s2524, %s2509, 128, 128, 8
        $region44: #{tpu_custom_call.1} parent=31 // pred_fallthru
          _
      $region32: #{tpu_custom_call.1} parent=5 // pred_fallthru
        _
      %p2532 = scmp.le.s32.totalorder 2, %s16
      // Predicated region
      $region45: #{tpu_custom_call.1} parent=5 // pred_check
        %p2533 = pneg %p2532
      $region46: #{tpu_custom_call.1} parent=5 // pred_check_branch
        %2535 = sbr.rel (%p2533) target = $region48
      $region47: #{tpu_custom_call.1} parent=5 // pred_region
        %s2536 = ssub.s32 %s16, 2
        // Predicated region
        $region49: #{tpu_custom_call.1} parent=47 // pred_check
          %p2537 = pneg %p127
        $region50: #{tpu_custom_call.1} parent=47 // pred_check_branch
          %2539 = sbr.rel (%p2537) target = $region52
        $region51: #{tpu_custom_call.1} parent=47 // pred_region
          %s2540 = sand.u32 %s112, 1
          %s2541 = scalar_lea.sflag [#allocation4], %s2540
          %s2542 = sand.u32 %s112, 1
          %s2543 = smul.addr %s2542, 192
          %s2544 = scalar_lea.vmem [#allocation7], %s2543
          %2545 = dma.done %s2541, 3072
        $region52: #{tpu_custom_call.1} parent=47 // pred_fallthru
          _
      $region48: #{tpu_custom_call.1} parent=5 // pred_fallthru
        _
    $region6: #{tpu_custom_call.1} parent=1 // loop_footer
      %s20 = sadd.s32 1, %s16
    $region7: #{tpu_custom_call.1} parent=1 // loop_footer_branch
      %15 = sbr.rel target = $region3
    $region8: #{tpu_custom_call.1} parent=1 // loop_exit
      _
    %2546 = vsyncpa [#allocation3], 1
    %s2547 = scalar_lea.sflag [#allocation3], 1
    %2548 = vsyncpa %s2547, 1
    %2549 = vsyncpa [#allocation6], 1
    %2550 = vsyncpa [#allocation4], 1
    %s2551 = scalar_lea.sflag [#allocation4], 1
    %2552 = vsyncpa %s2551, 1

</llo_original>
